<compile_context>
chip_gen: v6e
topology: v6e:2x2x1
jax: 0.10.0
libtpu: 0.0.40
codegen_flags: <defaults>
</compile_context>

<pallas_src>
import numpy as np
import jax
import jax.numpy as jnp
from jax.experimental import pallas as pl
from jax.experimental.pallas import tpu as pltpu


POOL_SIZES = (1, 2, 3, 6)
KKP = 64  # padded per-branch pooled-spatial size (>= 6*6); 4*KKP = 256 MXU lanes


# ----------------------------------------------------------------------------
# Precomputed matrices (PyTorch semantics: adaptive bins [floor(i*L/k),
# ceil((i+1)*L/k)); bilinear align_corners=False, src = max(0,(dst+0.5)*s-0.5)).
# ----------------------------------------------------------------------------
def adaptive_pool_matrix(in_size, out_size):
    M = np.zeros((in_size, out_size), np.float32)
    for i in range(out_size):
        start = int(np.floor(i * in_size / out_size))
        end = int(np.ceil((i + 1) * in_size / out_size))
        M[start:end, i] = 1.0 / (end - start)
    return M


def bilinear_matrix(in_size, out_size):
    M = np.zeros((in_size, out_size), np.float32)
    scale = in_size / out_size
    for o in range(out_size):
        src = max((o + 0.5) * scale - 0.5, 0.0)
        i0 = min(int(np.floor(src)), in_size - 1)
        i1 = min(i0 + 1, in_size - 1)
        lam = src - i0
        M[i0, o] += (1.0 - lam)
        M[i1, o] += lam
    return M


def make_mats(H, W):
    HW = H * W
    P_list, U_list = [], []
    P_cat = np.zeros((HW, 4 * KKP), np.float32)       # branch-packed pooling matrix
    U_stack = np.zeros((4 * KKP, HW), np.float32)     # vstacked, zero-row-padded upsample
    for b, k in enumerate(POOL_SIZES):
        P = np.kron(adaptive_pool_matrix(H, k), adaptive_pool_matrix(W, k))   # (HW, k*k)
        U = np.kron(bilinear_matrix(k, H), bilinear_matrix(k, W))             # (k*k, HW)
        P_list.append(jnp.asarray(P))
        U_list.append(jnp.asarray(U))
        P_cat[:, b * KKP:b * KKP + k * k] = P
        U_stack[b * KKP:b * KKP + k * k, :] = U
    # 0/1 validity masks for the 9 taps of the padding=1 3x3 conv in the flat
    # HW layout: mask[dh*3+dw, h*W+w] == 1 iff input (h+dh-1, w+dw-1) is in-bounds.
    tap_masks = np.zeros((9, H, W), np.float32)
    for dh in range(3):
        for dw in range(3):
            h0, h1 = max(0, 1 - dh), min(H, H + 1 - dh)
            w0, w1 = max(0, 1 - dw), min(W, W + 1 - dw)
            tap_masks[dh * 3 + dw, h0:h1, w0:w1] = 1.0
    return {
        "P_list": P_list, "U_list": U_list,
        "P_cat": jnp.asarray(P_cat),                      # (HW, 256)
        "U_stack": jnp.asarray(U_stack),                  # (256, HW)
        "tap_masks": jnp.asarray(tap_masks.reshape(9, HW)),
    }


def _pick_vmem_limit(default_bytes=32 * 1024 * 1024):
    # ~3/4 of physical VMEM (64 MiB on v7x, 128 MiB on v5e/v6e), capped; the
    # actual blocks at these shapes are far below any of these limits.
    try:
        cap = getattr(pltpu.get_tpu_info(), "vmem_capacity_bytes", None)
        if not cap or cap <= 0:
            return default_bytes
        return int(min(cap * 3 // 4, 100 * 1024 * 1024))
    except Exception:
        return default_bytes


# ----------------------------------------------------------------------------
# Forward wrapper (Pallas kernel defined as a closure over static dims)
# ----------------------------------------------------------------------------
def psp_head_forward(x, params, mats):
    N, C, H, W = x.shape
    HW = H * W
    Co = C // 4
    inter = params["w3"].shape[0]
    Ccat = params["w3"].shape[1]
    out_ch = params["b1"].shape[0]
    out_pad = ((out_ch + 7) // 8) * 8                     # lane/sublane-friendly store
    assert Ccat == C + 4 * Co

    f32, bf16 = jnp.float32, jnp.bfloat16

    # ---- host-side prep: BN folding, operand stacking, bf16 weight casts ----
    w_stack = (params["s_br"] * params["w_br"]).reshape(4 * Co, C).astype(bf16)   # (4Co, C)
    t_stack = params["t_br"].reshape(4 * Co, 1).astype(f32)                       # (4Co, 1)
    p_cat = mats["P_cat"].astype(bf16)                                            # (HW, 256)
    u_stack = mats["U_stack"].astype(bf16)                                        # (256, HW)
    tap_masks = mats["tap_masks"].astype(f32)                                     # (9, HW)

    bdm = np.zeros((4 * Co, 4 * KKP), np.float32)        # block-diagonal branch mask
    for b in range(4):
        bdm[b * Co:(b + 1) * Co, b * KKP:(b + 1) * KKP] = 1.0
    bdmask = jnp.asarray(bdm)

    # TODO(synk): conv3x3 implemented for lightweight=False (plain 3x3 conv,
    # padding=1, bias=False); the depthwise-separable variant is not modeled.
    w3_f = params["w3"] * params["s3"][:, None, None, None]                        # (inter, Ccat, 3, 3)
    w3_stack = jnp.transpose(w3_f, (0, 2, 3, 1)).reshape(inter, 9 * Ccat).astype(bf16)
    t3 = params["t3"].reshape(inter, 1).astype(f32)
    w1p = jnp.zeros((out_pad, inter), f32).at[:out_ch].set(params["w1"]).astype(bf16)
    b1p = jnp.zeros((out_pad, 1), f32).at[:out_ch].set(params["b1"].reshape(out_ch, 1))

    x_r = x.reshape(N, C, HW)                             # stays f32; cast happens in-kernel

    def fused_kernel(x_ref, p_ref, wst_ref, tst_ref, bdm_ref, ust_ref,
                     tmask_ref, w3s_ref, t3_ref, w1_ref, b1_ref, out_ref):
        # --- pyramid branches: pool -> 1x1 conv (+folded BN) -> ReLU -> upsample
        xv = x_ref[0]                                     # (C, HW) f32
        xb = xv.astype(jnp.bfloat16)                      # in-kernel cast (VPU, free)
        pooled = jnp.dot(xb, p_ref[...],
                         preferred_element_type=jnp.float32)             # (C, 256)
        y = jnp.dot(wst_ref[...], pooled.astype(jnp.bfloat16),
                    preferred_element_type=jnp.float32)                  # (4Co, 256)
        y = jnp.maximum(y + tst_ref[...], 0.0) * bdm_ref[...]            # shift+ReLU, mask off-branch
        feats = jnp.dot(y.astype(jnp.bfloat16), ust_ref[...],
                        preferred_element_type=jnp.float32)              # (4Co, HW)
        x_cat = jnp.concatenate([xv, feats], axis=0)                     # (Ccat, HW) f32

        # --- 3x3 conv (padding=1) as ONE K-stacked matmul over 9 rolled taps
        tmask = tmask_ref[...]                                           # (9, HW) f32
        blocks = []
        for dh in range(3):
            for dw in range(3):
                s = (dh - 1) * W + (dw - 1)               # flat input offset for this tap
                if s == 0:                                # center tap: no shift, always valid
                    blocks.append(x_cat.astype(jnp.bfloat16))
                else:
                    rolled = pltpu.roll(x_cat, shift=(-s) % HW, axis=1)  # out[p] = x[p + s]
                    j = dh * 3 + dw
                    blocks.append((rolled * tmask[j:j + 1, :]).astype(jnp.bfloat16))
        stacked = jnp.concatenate(blocks, axis=0)                        # (9*Ccat, HW) bf16
        acc = jnp.dot(w3s_ref[...], stacked,
                      preferred_element_type=jnp.float32)                # (inter, HW)
        h = jnp.maximum(acc + t3_ref[...], 0.0)                          # folded BN + ReLU
        # TODO(synk): nn.Dropout(0.1) is identity at inference; train mode not modeled.
        out = jnp.dot(w1_ref[...], h.astype(jnp.bfloat16),
                      preferred_element_type=jnp.float32) + b1_ref[...]  # (out_pad, HW)
        out_ref[0] = out                                                 # lane-dense store

    # TODO(synk): at production PSPHead sizes (Ccat~4096, HW~4096) the
    # whole-image-per-step block and the 9*Ccat K-stack exceed v7x's 64 MiB
    # VMEM; that needs a spatial (halo-DMA) grid axis plus a Ccat K axis with a
    # VMEM accumulator.  Not required at these shapes.
    # TODO(synk): for N=1 inference on v7x (2 TensorCores) add a parallel
    # spatial grid axis so the second core is not idle.
    out_p = pl.pallas_call(
        fused_kernel,
        out_shape=jax.ShapeDtypeStruct((N, out_pad, HW), jnp.float32),
        grid=(N,),
        in_specs=[
            pl.BlockSpec((1, C, HW), lambda n: (n, 0, 0)),
            pl.BlockSpec((HW, 4 * KKP), lambda n: (0, 0)),
            pl.BlockSpec((4 * Co, C), lambda n: (0, 0)),
            pl.BlockSpec((4 * Co, 1), lambda n: (0, 0)),
            pl.BlockSpec((4 * Co, 4 * KKP), lambda n: (0, 0)),
            pl.BlockSpec((4 * KKP, HW), lambda n: (0, 0)),
            pl.BlockSpec((9, HW), lambda n: (0, 0)),
            pl.BlockSpec((inter, 9 * Ccat), lambda n: (0, 0)),
            pl.BlockSpec((inter, 1), lambda n: (0, 0)),
            pl.BlockSpec((out_pad, inter), lambda n: (0, 0)),
            pl.BlockSpec((out_pad, 1), lambda n: (0, 0)),
        ],
        out_specs=pl.BlockSpec((1, out_pad, HW), lambda n: (n, 0, 0)),
        compiler_params=pltpu.CompilerParams(
            dimension_semantics=("parallel",),
            vmem_limit_bytes=_pick_vmem_limit()),
    )(x_r, p_cat, w_stack, t_stack, bdmask, u_stack, tap_masks,
      w3_stack, t3, w1p, b1p)

    # Output is already channel-major NCHW; just drop the out-channel padding.
    return out_p.reshape(N, out_pad, H, W)[:, :out_ch]


# ----------------------------------------------------------------------------
# Plain-JAX f32 reference (for correctness check)
# ----------------------------------------------------------------------------
def reference_forward(x, params, mats):
    N, C, H, W = x.shape
    feats = [x]
    for i in range(4):
        P = mats["P_list"][i]
        U = mats["U_list"][i]
        pooled = x.reshape(N, C, H * W) @ P
        y = jnp.einsum("oc,nck->nok", params["w_br"][i], pooled)
        y = jax.nn.relu(y * params["s_br"][i][None, :, :] + params["t_br"][i][None, :, :])
        feats.append((y @ U).reshape(N, -1, H, W))
    xc = jnp.concatenate(feats, axis=1)
    h = jax.lax.conv_general_dilated(
        xc, params["w3"], (1, 1), ((1, 1), (1, 1)),
        dimension_numbers=("NCHW", "OIHW", "NCHW"))
    h = jax.nn.relu(h * params["s3"][None, :, None, None] + params["t3"][None, :, None, None])
    out = jax.lax.conv_general_dilated(
        h, params["w1"][:, :, None, None], (1, 1), ((0, 0), (0, 0)),
        dimension_numbers=("NCHW", "OIHW", "NCHW"))
    return out + params["b1"][None, :, None, None]


# ----------------------------------------------------------------------------
# Deterministic parameter construction
# ----------------------------------------------------------------------------
def fold_bn(gamma, beta, mean, var, eps=1e-5):
    s = gamma / jnp.sqrt(var + eps)
    return s, beta - mean * s


def make_params(key, in_channels, out_channels):
    C = in_channels
    Co = int(C / 4)
    inter = C // 4
    Ccat = C + 4 * Co
    ks = jax.random.split(key, 32)
    ki = iter(range(32))

    w_br, s_br, t_br = [], [], []
    for _ in range(4):
        w = 0.3 * jax.random.normal(ks[next(ki)], (Co, C), jnp.float32)      # 1x1 conv, no bias
        gamma = jax.random.uniform(ks[next(ki)], (Co,), jnp.float32, 0.8, 1.2)
        beta = 0.1 * jax.random.normal(ks[next(ki)], (Co,), jnp.float32)
        mean = 0.1 * jax.random.normal(ks[next(ki)], (Co,), jnp.float32)
        var = jax.random.uniform(ks[next(ki)], (Co,), jnp.float32, 0.5, 1.5)
        s, t = fold_bn(gamma, beta, mean, var)
        w_br.append(w)
        s_br.append(s.reshape(Co, 1))
        t_br.append(t.reshape(Co, 1))

    w3 = jax.random.normal(ks[next(ki)], (inter, Ccat, 3, 3), jnp.float32) / np.sqrt(Ccat * 9)
    gamma3 = jax.random.uniform(ks[next(ki)], (inter,), jnp.float32, 0.8, 1.2)
    beta3 = 0.1 * jax.random.normal(ks[next(ki)], (inter,), jnp.float32)
    mean3 = 0.1 * jax.random.normal(ks[next(ki)], (inter,), jnp.float32)
    var3 = jax.random.uniform(ks[next(ki)], (inter,), jnp.float32, 0.5, 1.5)
    s3, t3 = fold_bn(gamma3, beta3, mean3, var3)

    w1 = jax.random.normal(ks[next(ki)], (out_channels, inter), jnp.float32) / np.sqrt(inter)
    b1 = 0.1 * jax.random.normal(ks[next(ki)], (out_channels,), jnp.float32)

    return {
        "w_br": jnp.stack(w_br), "s_br": jnp.stack(s_br), "t_br": jnp.stack(t_br),
        "w3": w3, "s3": s3, "t3": t3, "w1": w1, "b1": b1,
    }


if __name__ == "__main__":
    N, C, H, W = 2, 16, 16, 16          # batch, in_channels, spatial
    out_channels = 5                    # num classes

    key = jax.random.PRNGKey(0)
    kx, kp = jax.random.split(key)
    x = jax.random.normal(kx, (N, C, H, W), jnp.float32)

    params = make_params(kp, C, out_channels)
    mats = make_mats(H, W)

    out = jax.block_until_ready(psp_head_forward(x, params, mats))
    ref = jax.block_until_ready(reference_forward(x, params, mats))

    assert out.shape == (N, out_channels, H, W), out.shape
    err = float(np.abs(np.asarray(out) - np.asarray(ref)).max())
    # bf16 MXU operands with f32 accumulation -> bf16-level comparison tolerance
    assert np.allclose(np.asarray(out), np.asarray(ref), rtol=5e-2, atol=5e-2), err

    print("KERNEL_OK")
</pallas_src>

<mosaic_0001>
module attributes {stable_mosaic.version = 11 : i64} {
  func.func @fused_kernel(%arg0: i32, %arg1: memref<1x16x256xf32, #tpu.memory_space<vmem>>, %arg2: memref<256x256xbf16, #tpu.memory_space<vmem>>, %arg3: memref<16x16xbf16, #tpu.memory_space<vmem>>, %arg4: memref<16x1xf32, #tpu.memory_space<vmem>>, %arg5: memref<16x256xf32, #tpu.memory_space<vmem>>, %arg6: memref<256x256xbf16, #tpu.memory_space<vmem>>, %arg7: memref<9x256xf32, #tpu.memory_space<vmem>>, %arg8: memref<4x288xbf16, #tpu.memory_space<vmem>>, %arg9: memref<4x1xf32, #tpu.memory_space<vmem>>, %arg10: memref<8x4xbf16, #tpu.memory_space<vmem>>, %arg11: memref<8x1xf32, #tpu.memory_space<vmem>>, %arg12: memref<1x8x256xf32, #tpu.memory_space<vmem>>) attributes {dimension_semantics = [#tpu.dimension_semantics<parallel>], iteration_bounds = array<i64: 2>, scalar_prefetch = 0 : i64, scratch_operands = 0 : i64, tpu.core_type = #tpu.core_type<tc>, window_params = [{transform_indices = @transform_0, window_bounds = array<i64: 1, 16, 256>}, {pipeline_mode = #tpu.pipeline_mode<synchronous>, transform_indices = @transform_1, window_bounds = array<i64: 256, 256>}, {pipeline_mode = #tpu.pipeline_mode<synchronous>, transform_indices = @transform_2, window_bounds = array<i64: 16, 16>}, {pipeline_mode = #tpu.pipeline_mode<synchronous>, transform_indices = @transform_3, window_bounds = array<i64: 16, 1>}, {pipeline_mode = #tpu.pipeline_mode<synchronous>, transform_indices = @transform_4, window_bounds = array<i64: 16, 256>}, {pipeline_mode = #tpu.pipeline_mode<synchronous>, transform_indices = @transform_5, window_bounds = array<i64: 256, 256>}, {pipeline_mode = #tpu.pipeline_mode<synchronous>, transform_indices = @transform_6, window_bounds = array<i64: 9, 256>}, {pipeline_mode = #tpu.pipeline_mode<synchronous>, transform_indices = @transform_7, window_bounds = array<i64: 4, 288>}, {pipeline_mode = #tpu.pipeline_mode<synchronous>, transform_indices = @transform_8, window_bounds = array<i64: 4, 1>}, {pipeline_mode = #tpu.pipeline_mode<synchronous>, transform_indices = @transform_9, window_bounds = array<i64: 8, 4>}, {pipeline_mode = #tpu.pipeline_mode<synchronous>, transform_indices = @transform_10, window_bounds = array<i64: 8, 1>}, {transform_indices = @transform_11, window_bounds = array<i64: 1, 8, 256>}]} {
    %c0 = arith.constant 0 : index
    %c0_0 = arith.constant 0 : index
    %c0_1 = arith.constant 0 : index
    %0 = vector.load %arg1[%c0, %c0_0, %c0_1] : memref<1x16x256xf32, #tpu.memory_space<vmem>>, vector<1x16x256xf32>
    %1 = vector.shape_cast %0 : vector<1x16x256xf32> to vector<16x256xf32>
    %2 = arith.truncf %1 : vector<16x256xf32> to vector<16x256xbf16>
    %c0_2 = arith.constant 0 : index
    %c0_3 = arith.constant 0 : index
    %3 = vector.load %arg2[%c0_2, %c0_3] : memref<256x256xbf16, #tpu.memory_space<vmem>>, vector<256x256xbf16>
    %cst = arith.constant dense<0.000000e+00> : vector<16x256xf32>
    %4 = tpu.matmul %2, %3, %cst {dimension_numbers = #tpu.dot_dimension_numbers<[1], [0], [0], [1], [0, 0, 1, 1], [], []>} : vector<16x256xbf16>, vector<256x256xbf16>, vector<16x256xf32> -> vector<16x256xf32>
    %c0_4 = arith.constant 0 : index
    %c0_5 = arith.constant 0 : index
    %5 = vector.load %arg3[%c0_4, %c0_5] : memref<16x16xbf16, #tpu.memory_space<vmem>>, vector<16x16xbf16>
    %6 = arith.truncf %4 : vector<16x256xf32> to vector<16x256xbf16>
    %cst_6 = arith.constant dense<0.000000e+00> : vector<16x256xf32>
    %7 = tpu.matmul %5, %6, %cst_6 {dimension_numbers = #tpu.dot_dimension_numbers<[1], [0], [0], [1], [0, 0, 1, 1], [], []>} : vector<16x16xbf16>, vector<16x256xbf16>, vector<16x256xf32> -> vector<16x256xf32>
    %c0_7 = arith.constant 0 : index
    %c0_8 = arith.constant 0 : index
    %8 = vector.load %arg4[%c0_7, %c0_8] : memref<16x1xf32, #tpu.memory_space<vmem>>, vector<16x1xf32>
    %9 = vector.broadcast %8 : vector<16x1xf32> to vector<16x256xf32>
    %10 = arith.addf %7, %9 : vector<16x256xf32>
    %cst_9 = arith.constant 0.000000e+00 : f32
    %11 = vector.broadcast %cst_9 : f32 to vector<16x256xf32>
    %12 = arith.maximumf %10, %11 : vector<16x256xf32>
    %c0_10 = arith.constant 0 : index
    %c0_11 = arith.constant 0 : index
    %13 = vector.load %arg5[%c0_10, %c0_11] : memref<16x256xf32, #tpu.memory_space<vmem>>, vector<16x256xf32>
    %14 = arith.mulf %12, %13 : vector<16x256xf32>
    %15 = arith.truncf %14 : vector<16x256xf32> to vector<16x256xbf16>
    %c0_12 = arith.constant 0 : index
    %c0_13 = arith.constant 0 : index
    %16 = vector.load %arg6[%c0_12, %c0_13] : memref<256x256xbf16, #tpu.memory_space<vmem>>, vector<256x256xbf16>
    %cst_14 = arith.constant dense<0.000000e+00> : vector<16x256xf32>
    %17 = tpu.matmul %15, %16, %cst_14 {dimension_numbers = #tpu.dot_dimension_numbers<[1], [0], [0], [1], [0, 0, 1, 1], [], []>} : vector<16x256xbf16>, vector<256x256xbf16>, vector<16x256xf32> -> vector<16x256xf32>
    %18 = tpu.concatenate %1, %17 in 0 : vector<16x256xf32>, vector<16x256xf32> -> vector<32x256xf32>
    %c0_15 = arith.constant 0 : index
    %c0_16 = arith.constant 0 : index
    %19 = vector.load %arg7[%c0_15, %c0_16] : memref<9x256xf32, #tpu.memory_space<vmem>>, vector<9x256xf32>
    %c17_i32 = arith.constant 17 : i32
    %20 = tpu.dynamic_rotate %18 by %c17_i32 dim 1 : vector<32x256xf32>, i32 -> vector<32x256xf32>
    %21 = vector.extract_strided_slice %19 {offsets = [0, 0], sizes = [1, 256], strides = [1, 1]} : vector<9x256xf32> to vector<1x256xf32>
    %22 = vector.broadcast %21 : vector<1x256xf32> to vector<32x256xf32>
    %23 = arith.mulf %20, %22 : vector<32x256xf32>
    %24 = arith.truncf %23 : vector<32x256xf32> to vector<32x256xbf16>
    %c16_i32 = arith.constant 16 : i32
    %25 = tpu.dynamic_rotate %18 by %c16_i32 dim 1 : vector<32x256xf32>, i32 -> vector<32x256xf32>
    %26 = vector.extract_strided_slice %19 {offsets = [1, 0], sizes = [1, 256], strides = [1, 1]} : vector<9x256xf32> to vector<1x256xf32>
    %27 = vector.broadcast %26 : vector<1x256xf32> to vector<32x256xf32>
    %28 = arith.mulf %25, %27 : vector<32x256xf32>
    %29 = arith.truncf %28 : vector<32x256xf32> to vector<32x256xbf16>
    %c15_i32 = arith.constant 15 : i32
    %30 = tpu.dynamic_rotate %18 by %c15_i32 dim 1 : vector<32x256xf32>, i32 -> vector<32x256xf32>
    %31 = vector.extract_strided_slice %19 {offsets = [2, 0], sizes = [1, 256], strides = [1, 1]} : vector<9x256xf32> to vector<1x256xf32>
    %32 = vector.broadcast %31 : vector<1x256xf32> to vector<32x256xf32>
    %33 = arith.mulf %30, %32 : vector<32x256xf32>
    %34 = arith.truncf %33 : vector<32x256xf32> to vector<32x256xbf16>
    %c1_i32 = arith.constant 1 : i32
    %35 = tpu.dynamic_rotate %18 by %c1_i32 dim 1 : vector<32x256xf32>, i32 -> vector<32x256xf32>
    %36 = vector.extract_strided_slice %19 {offsets = [3, 0], sizes = [1, 256], strides = [1, 1]} : vector<9x256xf32> to vector<1x256xf32>
    %37 = vector.broadcast %36 : vector<1x256xf32> to vector<32x256xf32>
    %38 = arith.mulf %35, %37 : vector<32x256xf32>
    %39 = arith.truncf %38 : vector<32x256xf32> to vector<32x256xbf16>
    %40 = arith.truncf %18 : vector<32x256xf32> to vector<32x256xbf16>
    %c255_i32 = arith.constant 255 : i32
    %41 = tpu.dynamic_rotate %18 by %c255_i32 dim 1 : vector<32x256xf32>, i32 -> vector<32x256xf32>
    %42 = vector.extract_strided_slice %19 {offsets = [5, 0], sizes = [1, 256], strides = [1, 1]} : vector<9x256xf32> to vector<1x256xf32>
    %43 = vector.broadcast %42 : vector<1x256xf32> to vector<32x256xf32>
    %44 = arith.mulf %41, %43 : vector<32x256xf32>
    %45 = arith.truncf %44 : vector<32x256xf32> to vector<32x256xbf16>
    %c241_i32 = arith.constant 241 : i32
    %46 = tpu.dynamic_rotate %18 by %c241_i32 dim 1 : vector<32x256xf32>, i32 -> vector<32x256xf32>
    %47 = vector.extract_strided_slice %19 {offsets = [6, 0], sizes = [1, 256], strides = [1, 1]} : vector<9x256xf32> to vector<1x256xf32>
    %48 = vector.broadcast %47 : vector<1x256xf32> to vector<32x256xf32>
    %49 = arith.mulf %46, %48 : vector<32x256xf32>
    %50 = arith.truncf %49 : vector<32x256xf32> to vector<32x256xbf16>
    %c240_i32 = arith.constant 240 : i32
    %51 = tpu.dynamic_rotate %18 by %c240_i32 dim 1 : vector<32x256xf32>, i32 -> vector<32x256xf32>
    %52 = vector.extract_strided_slice %19 {offsets = [7, 0], sizes = [1, 256], strides = [1, 1]} : vector<9x256xf32> to vector<1x256xf32>
    %53 = vector.broadcast %52 : vector<1x256xf32> to vector<32x256xf32>
    %54 = arith.mulf %51, %53 : vector<32x256xf32>
    %55 = arith.truncf %54 : vector<32x256xf32> to vector<32x256xbf16>
    %c239_i32 = arith.constant 239 : i32
    %56 = tpu.dynamic_rotate %18 by %c239_i32 dim 1 : vector<32x256xf32>, i32 -> vector<32x256xf32>
    %57 = vector.extract_strided_slice %19 {offsets = [8, 0], sizes = [1, 256], strides = [1, 1]} : vector<9x256xf32> to vector<1x256xf32>
    %58 = vector.broadcast %57 : vector<1x256xf32> to vector<32x256xf32>
    %59 = arith.mulf %56, %58 : vector<32x256xf32>
    %60 = arith.truncf %59 : vector<32x256xf32> to vector<32x256xbf16>
    %61 = tpu.concatenate %24, %29, %34, %39, %40, %45, %50, %55, %60 in 0 : vector<32x256xbf16>, vector<32x256xbf16>, vector<32x256xbf16>, vector<32x256xbf16>, vector<32x256xbf16>, vector<32x256xbf16>, vector<32x256xbf16>, vector<32x256xbf16>, vector<32x256xbf16> -> vector<288x256xbf16>
    %c0_17 = arith.constant 0 : index
    %c0_18 = arith.constant 0 : index
    %62 = vector.load %arg8[%c0_17, %c0_18] : memref<4x288xbf16, #tpu.memory_space<vmem>>, vector<4x288xbf16>
    %cst_19 = arith.constant dense<0.000000e+00> : vector<4x256xf32>
    %63 = tpu.matmul %62, %61, %cst_19 {dimension_numbers = #tpu.dot_dimension_numbers<[1], [0], [0], [1], [0, 0, 1, 1], [], []>} : vector<4x288xbf16>, vector<288x256xbf16>, vector<4x256xf32> -> vector<4x256xf32>
    %c0_20 = arith.constant 0 : index
    %c0_21 = arith.constant 0 : index
    %64 = vector.load %arg9[%c0_20, %c0_21] : memref<4x1xf32, #tpu.memory_space<vmem>>, vector<4x1xf32>
    %65 = vector.broadcast %64 : vector<4x1xf32> to vector<4x256xf32>
    %66 = arith.addf %63, %65 : vector<4x256xf32>
    %cst_22 = arith.constant 0.000000e+00 : f32
    %67 = vector.broadcast %cst_22 : f32 to vector<4x256xf32>
    %68 = arith.maximumf %66, %67 : vector<4x256xf32>
    %c0_23 = arith.constant 0 : index
    %c0_24 = arith.constant 0 : index
    %69 = vector.load %arg10[%c0_23, %c0_24] : memref<8x4xbf16, #tpu.memory_space<vmem>>, vector<8x4xbf16>
    %70 = arith.truncf %68 : vector<4x256xf32> to vector<4x256xbf16>
    %cst_25 = arith.constant dense<0.000000e+00> : vector<8x256xf32>
    %71 = tpu.matmul %69, %70, %cst_25 {dimension_numbers = #tpu.dot_dimension_numbers<[1], [0], [0], [1], [0, 0, 1, 1], [], []>} : vector<8x4xbf16>, vector<4x256xbf16>, vector<8x256xf32> -> vector<8x256xf32>
    %c0_26 = arith.constant 0 : index
    %c0_27 = arith.constant 0 : index
    %72 = vector.load %arg11[%c0_26, %c0_27] : memref<8x1xf32, #tpu.memory_space<vmem>>, vector<8x1xf32>
    %73 = vector.broadcast %72 : vector<8x1xf32> to vector<8x256xf32>
    %74 = arith.addf %71, %73 : vector<8x256xf32>
    %c0_28 = arith.constant 0 : index
    %c0_29 = arith.constant 0 : index
    %c0_30 = arith.constant 0 : index
    %75 = vector.load %arg12[%c0_28, %c0_29, %c0_30] : memref<1x8x256xf32, #tpu.memory_space<vmem>>, vector<1x8x256xf32>
    %76 = vector.shape_cast %75 : vector<1x8x256xf32> to vector<8x256xf32>
    %77 = vector.shape_cast %74 : vector<8x256xf32> to vector<1x8x256xf32>
    tpu.vector_store %arg12[%c0_28, %c0_29, %c0_30], %77 {strides = array<i32>} : memref<1x8x256xf32, #tpu.memory_space<vmem>>, vector<1x8x256xf32>,
    return
  }
  func.func @transform_0(%arg0: i32) -> (i32, i32, i32) {
    %c0_i32 = arith.constant 0 : i32
    %c0_i32_0 = arith.constant 0 : i32
    %c0_i32_1 = arith.constant 0 : i32
    return %arg0, %c0_i32, %c0_i32_0 : i32, i32, i32
  }
  func.func @transform_1(%arg0: i32) -> (i32, i32) {
    %c0_i32 = arith.constant 0 : i32
    %c0_i32_0 = arith.constant 0 : i32
    %c0_i32_1 = arith.constant 0 : i32
    return %c0_i32, %c0_i32_0 : i32, i32
  }
  func.func @transform_2(%arg0: i32) -> (i32, i32) {
    %c0_i32 = arith.constant 0 : i32
    %c0_i32_0 = arith.constant 0 : i32
    %c0_i32_1 = arith.constant 0 : i32
    return %c0_i32, %c0_i32_0 : i32, i32
  }
  func.func @transform_3(%arg0: i32) -> (i32, i32) {
    %c0_i32 = arith.constant 0 : i32
    %c0_i32_0 = arith.constant 0 : i32
    %c0_i32_1 = arith.constant 0 : i32
    return %c0_i32, %c0_i32_0 : i32, i32
  }
  func.func @transform_4(%arg0: i32) -> (i32, i32) {
    %c0_i32 = arith.constant 0 : i32
    %c0_i32_0 = arith.constant 0 : i32
    %c0_i32_1 = arith.constant 0 : i32
    return %c0_i32, %c0_i32_0 : i32, i32
  }
  func.func @transform_5(%arg0: i32) -> (i32, i32) {
    %c0_i32 = arith.constant 0 : i32
    %c0_i32_0 = arith.constant 0 : i32
    %c0_i32_1 = arith.constant 0 : i32
    return %c0_i32, %c0_i32_0 : i32, i32
  }
  func.func @transform_6(%arg0: i32) -> (i32, i32) {
    %c0_i32 = arith.constant 0 : i32
    %c0_i32_0 = arith.constant 0 : i32
    %c0_i32_1 = arith.constant 0 : i32
    return %c0_i32, %c0_i32_0 : i32, i32
  }
  func.func @transform_7(%arg0: i32) -> (i32, i32) {
    %c0_i32 = arith.constant 0 : i32
    %c0_i32_0 = arith.constant 0 : i32
    %c0_i32_1 = arith.constant 0 : i32
    return %c0_i32, %c0_i32_0 : i32, i32
  }
  func.func @transform_8(%arg0: i32) -> (i32, i32) {
    %c0_i32 = arith.constant 0 : i32
    %c0_i32_0 = arith.constant 0 : i32
    %c0_i32_1 = arith.constant 0 : i32
    return %c0_i32, %c0_i32_0 : i32, i32
  }
  func.func @transform_9(%arg0: i32) -> (i32, i32) {
    %c0_i32 = arith.constant 0 : i32
    %c0_i32_0 = arith.constant 0 : i32
    %c0_i32_1 = arith.constant 0 : i32
    return %c0_i32, %c0_i32_0 : i32, i32
  }
  func.func @transform_10(%arg0: i32) -> (i32, i32) {
    %c0_i32 = arith.constant 0 : i32
    %c0_i32_0 = arith.constant 0 : i32
    %c0_i32_1 = arith.constant 0 : i32
    return %c0_i32, %c0_i32_0 : i32, i32
  }
  func.func @transform_11(%arg0: i32) -> (i32, i32, i32) {
    %c0_i32 = arith.constant 0 : i32
    %c0_i32_0 = arith.constant 0 : i32
    %c0_i32_1 = arith.constant 0 : i32
    return %arg0, %c0_i32, %c0_i32_0 : i32, i32, i32
  }
}

</mosaic_0001>

<llo_original>
// kernel: tpu_custom_call.1
$region0: #{tpu_custom_call.1}
  #allocation0 [shape = 'u32[]', space=smem, size = 0x4, offset = 0x4, fixed_abs, tag = 'smem constant byte address 0x4 - core index']
  #allocation1 [shape = 'u32[144,128]{1,0:T(1,128)}', space=vmem, size = 0x12000, scoped, tag = 'internal scratch']
  %s0 = inlined_call_operand.hbm [shape: f32[2,16,256], index: 0, kind: input, shape index: {}]
  %s1 = inlined_call_operand.hbm [shape: bf16[256,256], index: 1, kind: input, shape index: {}]
  %s2 = inlined_call_operand.vmem [shape: bf16[16,16], index: 2, kind: input, shape index: {}]
  %s3 = inlined_call_operand.vmem [shape: f32[16,1], index: 3, kind: input, shape index: {}]
  %s4 = inlined_call_operand.vmem [shape: f32[16,256], index: 4, kind: input, shape index: {}]
  %s5 = inlined_call_operand.hbm [shape: bf16[256,256], index: 5, kind: input, shape index: {}]
  %s6 = inlined_call_operand.hbm [shape: f32[9,256], index: 6, kind: input, shape index: {}]
  %s7 = inlined_call_operand.vmem [shape: bf16[4,288], index: 7, kind: input, shape index: {}]
  %s8 = inlined_call_operand.vmem [shape: f32[4,1], index: 8, kind: input, shape index: {}]
  %s9 = inlined_call_operand.vmem [shape: bf16[8,4], index: 9, kind: input, shape index: {}]
  %s10 = inlined_call_operand.vmem [shape: f32[8,1], index: 10, kind: input, shape index: {}]
  %s11 = inlined_call_operand.hbm [shape: f32[2,8,256], index: 11, kind: output, shape index: {}]
  %s12 = sld [smem:[#allocation0]]
  $region93: #{tpu_custom_call.1} parent=0
    _
  %s14 = ssub.s32 1, %s12
  %s15 = scalar_select 0, %s14, %s12
  $region1: #{tpu_custom_call.1} parent=0
    #allocation2 [shape = 'u8[32768]{0}', space=vmem, size = 0x8000, scoped, tag = 'input window, operand 0']
    #allocation3 [shape = 's32[2]{0}', space=sflag, size = 0x8, scoped, tag = 'scoped memory for tpu_custom_call.1']
    #allocation4 [shape = 's32[2]{0}', space=sflag, size = 0x8, scoped, tag = 'scoped memory for tpu_custom_call.1']
    #allocation5 [shape = 'u8[131072]{0}', space=vmem, size = 0x20000, scoped, tag = 'input window, operand 1, single buffered']
    #allocation6 [shape = 's32[1]{0}', space=sflag, size = 0x4, scoped, tag = 'scoped memory for tpu_custom_call.1']
    #allocation7 [shape = 'u8[131072]{0}', space=vmem, size = 0x20000, scoped, tag = 'input window, operand 5, single buffered']
    #allocation8 [shape = 'u8[16384]{0}', space=vmem, size = 0x4000, scoped, tag = 'input window, operand 6, single buffered']
    #allocation9 [shape = 's32[1]{0}', space=sflag, size = 0x4, scoped, tag = 'scoped memory for tpu_custom_call.1']
    #allocation10 [shape = 'u8[16384]{0}', space=vmem, size = 0x4000, scoped, tag = 'output window, operand 0']
    %16 = vsyncpa [#allocation3], 0
    %s17 = scalar_lea.sflag [#allocation3], 1
    %18 = vsyncpa %s17, 0
    %19 = vsyncpa [#allocation6], 0
    %20 = vsyncpa [#allocation9], 0
    %21 = vsyncpa [#allocation4], 0
    %s22 = scalar_lea.sflag [#allocation4], 1
    %23 = vsyncpa %s22, 0
    loop: start=0, step=1, limit=4
    $region2: #{tpu_custom_call.1} parent=1 // loop_pre_header
      _
    $region3: #{tpu_custom_call.1} parent=1 // loop_header
      %s25 = sphi 0, %s29
      %p26 = scmp.ge.s32.totalorder %s25, 4
      %s35 = sphi 0, %s37
      %s38 = sphi 0, %s35
      %s39 = sphi 0, %s38
      %s55 = sphi 0, %s39
      %s59 = sphi 0, %s59
      %s61 = sphi 0, %s59
      %s62 = sphi 0, %s61
      %s76 = sphi 0, %s62
      %s80 = sphi 0, %s80
      %s82 = sphi 0, %s80
      %s83 = sphi 0, %s82
      %s97 = sphi 0, %s83
      %s101 = sphi 0, %s101
      %s103 = sphi 0, %s101
      %s104 = sphi 0, %s103
      %s118 = sphi 0, %s104
      %s122 = sphi 0, %s122
      %s124 = sphi 0, %s122
      %s125 = sphi 0, %s124
      %s139 = sphi 0, %s125
      %s143 = sphi 0, %s143
      %s145 = sphi 0, %s143
      %s146 = sphi 0, %s145
      %s160 = sphi 0, %s146
      %s164 = sphi 0, %s164
      %s166 = sphi 0, %s164
      %s167 = sphi 0, %s166
      %s181 = sphi 0, %s167
      %s185 = sphi 0, %s185
      %s187 = sphi 0, %s185
      %s188 = sphi 0, %s187
      %s202 = sphi 0, %s188
      %s206 = sphi 0, %s206
      %s208 = sphi 0, %s206
      %s209 = sphi 0, %s208
      %s223 = sphi 0, %s209
      %s227 = sphi 0, %s227
      %s229 = sphi 0, %s227
      %s230 = sphi 0, %s229
      %s244 = sphi 0, %s230
      %s248 = sphi 0, %s248
      %s250 = sphi 0, %s248
      %s251 = sphi 0, %s250
      %s265 = sphi 0, %s251
      %s271 = sphi 0, %s273
      %s274 = sphi 0, %s271
      %s275 = sphi 0, %s274
      %s291 = sphi 0, %s275
    $region4: #{tpu_custom_call.1} parent=1 // loop_header_branch
      %28 = sbr.rel (%p26) target = $region8
    $region5: #{tpu_custom_call.1} parent=1 // loop_body
      %s30 = ssub.s32 %s25, 1
      %s31 = ssub.s32 %s25, 2
      %s32 = sadd.s32 %s25, 1
      %s33 = ssub.s32 %s25, %s32
      %p34 = scmp.eq.s32.totalorder %s33, 0
      %s36 = sadd.s32 %s35, 1
      %s37 = scalar_select %p34, %s35, %s36
      %p40 = pneg %p34
      %p41 = scmp.eq.s32.totalorder %s25, 1
      %p42 = por %p40, %p41
      %p43 = scmp.ne.s32.totalorder %s35, %s38
      %p44 = scmp.eq.s32.totalorder %s25, 0
      %p45 = por %p43, %p44
      %p46 = scmp.ne.s32.totalorder %s35, %s38
      %p47 = scmp.eq.s32.totalorder %s30, 1
      %p48 = por %p46, %p47
      %p49 = scmp.ne.s32.totalorder %s38, %s39
      %p50 = scmp.eq.s32.totalorder %s30, 0
      %p51 = por %p49, %p50
      %p52 = scmp.ne.s32.totalorder %s38, %s39
      %p53 = scmp.eq.s32.totalorder %s31, 1
      %p54 = por %p52, %p53
      %p56 = scmp.ne.s32.totalorder %s39, %s55
      %p57 = scmp.eq.s32.totalorder %s31, 0
      %p58 = por %p56, %p57
      %s60 = sadd.s32 %s59, 1
      %p63 = scmp.eq.s32.totalorder %s25, 1
      %p64 = scmp.ne.s32.totalorder %s59, %s61
      %p65 = scmp.eq.s32.totalorder %s25, 0
      %p66 = por %p64, %p65
      %p67 = scmp.ne.s32.totalorder %s59, %s61
      %p68 = scmp.eq.s32.totalorder %s30, 1
      %p69 = por %p67, %p68
      %p70 = scmp.ne.s32.totalorder %s61, %s62
      %p71 = scmp.eq.s32.totalorder %s30, 0
      %p72 = por %p70, %p71
      %p73 = scmp.ne.s32.totalorder %s61, %s62
      %p74 = scmp.eq.s32.totalorder %s31, 1
      %p75 = por %p73, %p74
      %p77 = scmp.ne.s32.totalorder %s62, %s76
      %p78 = scmp.eq.s32.totalorder %s31, 0
      %p79 = por %p77, %p78
      %s81 = sadd.s32 %s80, 1
      %p84 = scmp.eq.s32.totalorder %s25, 1
      %p85 = scmp.ne.s32.totalorder %s80, %s82
      %p86 = scmp.eq.s32.totalorder %s25, 0
      %p87 = por %p85, %p86
      %p88 = scmp.ne.s32.totalorder %s80, %s82
      %p89 = scmp.eq.s32.totalorder %s30, 1
      %p90 = por %p88, %p89
      %p91 = scmp.ne.s32.totalorder %s82, %s83
      %p92 = scmp.eq.s32.totalorder %s30, 0
      %p93 = por %p91, %p92
      %p94 = scmp.ne.s32.totalorder %s82, %s83
      %p95 = scmp.eq.s32.totalorder %s31, 1
      %p96 = por %p94, %p95
      %p98 = scmp.ne.s32.totalorder %s83, %s97
      %p99 = scmp.eq.s32.totalorder %s31, 0
      %p100 = por %p98, %p99
      %s102 = sadd.s32 %s101, 1
      %p105 = scmp.eq.s32.totalorder %s25, 1
      %p106 = scmp.ne.s32.totalorder %s101, %s103
      %p107 = scmp.eq.s32.totalorder %s25, 0
      %p108 = por %p106, %p107
      %p109 = scmp.ne.s32.totalorder %s101, %s103
      %p110 = scmp.eq.s32.totalorder %s30, 1
      %p111 = por %p109, %p110
      %p112 = scmp.ne.s32.totalorder %s103, %s104
      %p113 = scmp.eq.s32.totalorder %s30, 0
      %p114 = por %p112, %p113
      %p115 = scmp.ne.s32.totalorder %s103, %s104
      %p116 = scmp.eq.s32.totalorder %s31, 1
      %p117 = por %p115, %p116
      %p119 = scmp.ne.s32.totalorder %s104, %s118
      %p120 = scmp.eq.s32.totalorder %s31, 0
      %p121 = por %p119, %p120
      %s123 = sadd.s32 %s122, 1
      %p126 = scmp.eq.s32.totalorder %s25, 1
      %p127 = scmp.ne.s32.totalorder %s122, %s124
      %p128 = scmp.eq.s32.totalorder %s25, 0
      %p129 = por %p127, %p128
      %p130 = scmp.ne.s32.totalorder %s122, %s124
      %p131 = scmp.eq.s32.totalorder %s30, 1
      %p132 = por %p130, %p131
      %p133 = scmp.ne.s32.totalorder %s124, %s125
      %p134 = scmp.eq.s32.totalorder %s30, 0
      %p135 = por %p133, %p134
      %p136 = scmp.ne.s32.totalorder %s124, %s125
      %p137 = scmp.eq.s32.totalorder %s31, 1
      %p138 = por %p136, %p137
      %p140 = scmp.ne.s32.totalorder %s125, %s139
      %p141 = scmp.eq.s32.totalorder %s31, 0
      %p142 = por %p140, %p141
      %s144 = sadd.s32 %s143, 1
      %p147 = scmp.eq.s32.totalorder %s25, 1
      %p148 = scmp.ne.s32.totalorder %s143, %s145
      %p149 = scmp.eq.s32.totalorder %s25, 0
      %p150 = por %p148, %p149
      %p151 = scmp.ne.s32.totalorder %s143, %s145
      %p152 = scmp.eq.s32.totalorder %s30, 1
      %p153 = por %p151, %p152
      %p154 = scmp.ne.s32.totalorder %s145, %s146
      %p155 = scmp.eq.s32.totalorder %s30, 0
      %p156 = por %p154, %p155
      %p157 = scmp.ne.s32.totalorder %s145, %s146
      %p158 = scmp.eq.s32.totalorder %s31, 1
      %p159 = por %p157, %p158
      %p161 = scmp.ne.s32.totalorder %s146, %s160
      %p162 = scmp.eq.s32.totalorder %s31, 0
      %p163 = por %p161, %p162
      %s165 = sadd.s32 %s164, 1
      %p168 = scmp.eq.s32.totalorder %s25, 1
      %p169 = scmp.ne.s32.totalorder %s164, %s166
      %p170 = scmp.eq.s32.totalorder %s25, 0
      %p171 = por %p169, %p170
      %p172 = scmp.ne.s32.totalorder %s164, %s166
      %p173 = scmp.eq.s32.totalorder %s30, 1
      %p174 = por %p172, %p173
      %p175 = scmp.ne.s32.totalorder %s166, %s167
      %p176 = scmp.eq.s32.totalorder %s30, 0
      %p177 = por %p175, %p176
      %p178 = scmp.ne.s32.totalorder %s166, %s167
      %p179 = scmp.eq.s32.totalorder %s31, 1
      %p180 = por %p178, %p179
      %p182 = scmp.ne.s32.totalorder %s167, %s181
      %p183 = scmp.eq.s32.totalorder %s31, 0
      %p184 = por %p182, %p183
      %s186 = sadd.s32 %s185, 1
      %p189 = scmp.eq.s32.totalorder %s25, 1
      %p190 = scmp.ne.s32.totalorder %s185, %s187
      %p191 = scmp.eq.s32.totalorder %s25, 0
      %p192 = por %p190, %p191
      %p193 = scmp.ne.s32.totalorder %s185, %s187
      %p194 = scmp.eq.s32.totalorder %s30, 1
      %p195 = por %p193, %p194
      %p196 = scmp.ne.s32.totalorder %s187, %s188
      %p197 = scmp.eq.s32.totalorder %s30, 0
      %p198 = por %p196, %p197
      %p199 = scmp.ne.s32.totalorder %s187, %s188
      %p200 = scmp.eq.s32.totalorder %s31, 1
      %p201 = por %p199, %p200
      %p203 = scmp.ne.s32.totalorder %s188, %s202
      %p204 = scmp.eq.s32.totalorder %s31, 0
      %p205 = por %p203, %p204
      %s207 = sadd.s32 %s206, 1
      %p210 = scmp.eq.s32.totalorder %s25, 1
      %p211 = scmp.ne.s32.totalorder %s206, %s208
      %p212 = scmp.eq.s32.totalorder %s25, 0
      %p213 = por %p211, %p212
      %p214 = scmp.ne.s32.totalorder %s206, %s208
      %p215 = scmp.eq.s32.totalorder %s30, 1
      %p216 = por %p214, %p215
      %p217 = scmp.ne.s32.totalorder %s208, %s209
      %p218 = scmp.eq.s32.totalorder %s30, 0
      %p219 = por %p217, %p218
      %p220 = scmp.ne.s32.totalorder %s208, %s209
      %p221 = scmp.eq.s32.totalorder %s31, 1
      %p222 = por %p220, %p221
      %p224 = scmp.ne.s32.totalorder %s209, %s223
      %p225 = scmp.eq.s32.totalorder %s31, 0
      %p226 = por %p224, %p225
      %s228 = sadd.s32 %s227, 1
      %p231 = scmp.eq.s32.totalorder %s25, 1
      %p232 = scmp.ne.s32.totalorder %s227, %s229
      %p233 = scmp.eq.s32.totalorder %s25, 0
      %p234 = por %p232, %p233
      %p235 = scmp.ne.s32.totalorder %s227, %s229
      %p236 = scmp.eq.s32.totalorder %s30, 1
      %p237 = por %p235, %p236
      %p238 = scmp.ne.s32.totalorder %s229, %s230
      %p239 = scmp.eq.s32.totalorder %s30, 0
      %p240 = por %p238, %p239
      %p241 = scmp.ne.s32.totalorder %s229, %s230
      %p242 = scmp.eq.s32.totalorder %s31, 1
      %p243 = por %p241, %p242
      %p245 = scmp.ne.s32.totalorder %s230, %s244
      %p246 = scmp.eq.s32.totalorder %s31, 0
      %p247 = por %p245, %p246
      %s249 = sadd.s32 %s248, 1
      %p252 = scmp.eq.s32.totalorder %s25, 1
      %p253 = scmp.ne.s32.totalorder %s248, %s250
      %p254 = scmp.eq.s32.totalorder %s25, 0
      %p255 = por %p253, %p254
      %p256 = scmp.ne.s32.totalorder %s248, %s250
      %p257 = scmp.eq.s32.totalorder %s30, 1
      %p258 = por %p256, %p257
      %p259 = scmp.ne.s32.totalorder %s250, %s251
      %p260 = scmp.eq.s32.totalorder %s30, 0
      %p261 = por %p259, %p260
      %p262 = scmp.ne.s32.totalorder %s250, %s251
      %p263 = scmp.eq.s32.totalorder %s31, 1
      %p264 = por %p262, %p263
      %p266 = scmp.ne.s32.totalorder %s251, %s265
      %p267 = scmp.eq.s32.totalorder %s31, 0
      %p268 = por %p266, %p267
      %s269 = ssub.s32 %s25, %s32
      %p270 = scmp.eq.s32.totalorder %s269, 0
      %s272 = sadd.s32 %s271, 1
      %s273 = scalar_select %p270, %s271, %s272
      %p276 = pneg %p270
      %p277 = scmp.eq.s32.totalorder %s25, 1
      %p278 = por %p276, %p277
      %p279 = scmp.ne.s32.totalorder %s271, %s274
      %p280 = scmp.eq.s32.totalorder %s25, 0
      %p281 = por %p279, %p280
      %p282 = scmp.ne.s32.totalorder %s271, %s274
      %p283 = scmp.eq.s32.totalorder %s30, 1
      %p284 = por %p282, %p283
      %p285 = scmp.ne.s32.totalorder %s274, %s275
      %p286 = scmp.eq.s32.totalorder %s30, 0
      %p287 = por %p285, %p286
      %p288 = scmp.ne.s32.totalorder %s274, %s275
      %p289 = scmp.eq.s32.totalorder %s31, 1
      %p290 = por %p288, %p289
      %p292 = scmp.ne.s32.totalorder %s275, %s291
      %p293 = scmp.eq.s32.totalorder %s31, 0
      %p294 = por %p292, %p293
      %p295 = scmp.le.s32.totalorder 1, %s25
      %p296 = scmp.lt.s32.totalorder %s25, 3
      %p297 = pnand %p295, %p296
      %p298 = pneg %p297
      // Predicated region
      $region9: #{tpu_custom_call.1} parent=5 // pred_check
        _
      $region10: #{tpu_custom_call.1} parent=5 // pred_check_branch
        %300 = sbr.rel (%p297) target = $region12
      $region11: #{tpu_custom_call.1} parent=5 // pred_region
        %s301 = ssub.s32 %s25, 1
        // Predicated region
        $region13: #{tpu_custom_call.1} parent=11 // pred_check
          %p302 = pneg %p72
        $region14: #{tpu_custom_call.1} parent=11 // pred_check_branch
          %304 = sbr.rel (%p302) target = $region16
        $region15: #{tpu_custom_call.1} parent=11 // pred_region
          %s306 = ssub.s32 4096, 4096
          %307 = vsyncadd [#allocation6], %s306
          %s308 = sshll.u32 [#allocation5], 4
          %s309 = int_to_ptr.vmem [resolvable:$true] %s308
          %314 = dma.hbm_to_vmem [thread:$0]  %s1, 4096, %s309, [#allocation6], 128, 128, 8
        $region16: #{tpu_custom_call.1} parent=11 // pred_fallthru
          _
        // Predicated region
        $region17: #{tpu_custom_call.1} parent=11 // pred_check
          %p315 = pneg %p93
        $region18: #{tpu_custom_call.1} parent=11 // pred_check_branch
          %317 = sbr.rel (%p315) target = $region20
        $region19: #{tpu_custom_call.1} parent=11 // pred_region
          _
        $region20: #{tpu_custom_call.1} parent=11 // pred_fallthru
          _
        // Predicated region
        $region21: #{tpu_custom_call.1} parent=11 // pred_check
          %p318 = pneg %p114
        $region22: #{tpu_custom_call.1} parent=11 // pred_check_branch
          %320 = sbr.rel (%p318) target = $region24
        $region23: #{tpu_custom_call.1} parent=11 // pred_region
          _
        $region24: #{tpu_custom_call.1} parent=11 // pred_fallthru
          _
        // Predicated region
        $region25: #{tpu_custom_call.1} parent=11 // pred_check
          %p321 = pneg %p135
        $region26: #{tpu_custom_call.1} parent=11 // pred_check_branch
          %323 = sbr.rel (%p321) target = $region28
        $region27: #{tpu_custom_call.1} parent=11 // pred_region
          _
        $region28: #{tpu_custom_call.1} parent=11 // pred_fallthru
          _
        // Predicated region
        $region29: #{tpu_custom_call.1} parent=11 // pred_check
          %p324 = pneg %p156
        $region30: #{tpu_custom_call.1} parent=11 // pred_check_branch
          %326 = sbr.rel (%p324) target = $region32
        $region31: #{tpu_custom_call.1} parent=11 // pred_region
          %s328 = ssub.s32 4096, 4096
          %329 = vsyncadd [#allocation6], %s328
          %s330 = sshll.u32 [#allocation7], 4
          %s331 = int_to_ptr.vmem [resolvable:$true] %s330
          %336 = dma.hbm_to_vmem [thread:$0]  %s5, 4096, %s331, [#allocation6], 128, 128, 8
        $region32: #{tpu_custom_call.1} parent=11 // pred_fallthru
          _
        // Predicated region
        $region33: #{tpu_custom_call.1} parent=11 // pred_check
          %p337 = pneg %p177
        $region34: #{tpu_custom_call.1} parent=11 // pred_check_branch
          %339 = sbr.rel (%p337) target = $region36
        $region35: #{tpu_custom_call.1} parent=11 // pred_region
          %s341 = ssub.s32 512, 512
          %342 = vsyncadd [#allocation9], %s341
          %s343 = sshll.u32 [#allocation8], 4
          %s344 = int_to_ptr.vmem [resolvable:$true] %s343
          %349 = dma.hbm_to_vmem [thread:$0]  %s6, 512, %s344, [#allocation9], 256, 256, 16
        $region36: #{tpu_custom_call.1} parent=11 // pred_fallthru
          _
        // Predicated region
        $region37: #{tpu_custom_call.1} parent=11 // pred_check
          %p350 = pneg %p198
        $region38: #{tpu_custom_call.1} parent=11 // pred_check_branch
          %352 = sbr.rel (%p350) target = $region40
        $region39: #{tpu_custom_call.1} parent=11 // pred_region
          _
        $region40: #{tpu_custom_call.1} parent=11 // pred_fallthru
          _
        // Predicated region
        $region41: #{tpu_custom_call.1} parent=11 // pred_check
          %p353 = pneg %p219
        $region42: #{tpu_custom_call.1} parent=11 // pred_check_branch
          %355 = sbr.rel (%p353) target = $region44
        $region43: #{tpu_custom_call.1} parent=11 // pred_region
          _
        $region44: #{tpu_custom_call.1} parent=11 // pred_fallthru
          _
        // Predicated region
        $region45: #{tpu_custom_call.1} parent=11 // pred_check
          %p356 = pneg %p240
        $region46: #{tpu_custom_call.1} parent=11 // pred_check_branch
          %358 = sbr.rel (%p356) target = $region48
        $region47: #{tpu_custom_call.1} parent=11 // pred_region
          _
        $region48: #{tpu_custom_call.1} parent=11 // pred_fallthru
          _
        // Predicated region
        $region49: #{tpu_custom_call.1} parent=11 // pred_check
          %p359 = pneg %p261
        $region50: #{tpu_custom_call.1} parent=11 // pred_check_branch
          %361 = sbr.rel (%p359) target = $region52
        $region51: #{tpu_custom_call.1} parent=11 // pred_region
          _
        $region52: #{tpu_custom_call.1} parent=11 // pred_fallthru
          _
      $region12: #{tpu_custom_call.1} parent=5 // pred_fallthru
        _
      %p362 = scmp.lt.s32.totalorder %s25, 2
      // Predicated region
      $region53: #{tpu_custom_call.1} parent=5 // pred_check
        %p363 = pneg %p362
      $region54: #{tpu_custom_call.1} parent=5 // pred_check_branch
        %365 = sbr.rel (%p363) target = $region56
      $region55: #{tpu_custom_call.1} parent=5 // pred_region
        // Predicated region
        $region57: #{tpu_custom_call.1} parent=55 // pred_check
          %p366 = pneg %p45
        $region58: #{tpu_custom_call.1} parent=55 // pred_check_branch
          %368 = sbr.rel (%p366) target = $region60
        $region59: #{tpu_custom_call.1} parent=55 // pred_region
          %s369 = sand.u32 %s35, 1
          %s370 = scalar_lea.sflag [#allocation3], %s369
          %s371 = sand.u32 %s35, 1
          %s372 = smul.addr %s371, 32
          %s373 = scalar_lea.vmem [#allocation2], %s372
          %s375 = ssub.s32 512, 512
          %376 = vsyncadd %s370, %s375
          %s377 = smul.addr %s25, 4
          %s378 = smul.addr %s377, 128
          %s379 = scalar_lea.hbm %s0, %s378
          %s380 = sshll.u32 %s373, 4
          %s381 = int_to_ptr.vmem [resolvable:$true] %s380
          %386 = dma.hbm_to_vmem [thread:$0]  %s379, 512, %s381, %s370, 256, 256, 16
        $region60: #{tpu_custom_call.1} parent=55 // pred_fallthru
          _
      $region56: #{tpu_custom_call.1} parent=5 // pred_fallthru
        _
      %p387 = scmp.le.s32.totalorder 1, %s25
      %p388 = scmp.lt.s32.totalorder %s25, 3
      %p389 = pnand %p387, %p388
      %p390 = pneg %p389
      // Predicated region
      $region61: #{tpu_custom_call.1} parent=5 // pred_check
        _
      $region62: #{tpu_custom_call.1} parent=5 // pred_check_branch
        %392 = sbr.rel (%p389) target = $region64
      $region63: #{tpu_custom_call.1} parent=5 // pred_region
        %s393 = ssub.s32 %s25, 1
        %s394 = sand.u32 %s38, 1
        %s395 = scalar_lea.sflag [#allocation3], %s394
        %s396 = sand.u32 %s38, 1
        %s397 = smul.addr %s396, 32
        %s398 = scalar_lea.vmem [#allocation2], %s397
        // Predicated region
        $region65: #{tpu_custom_call.1} parent=63 // pred_check
          %p399 = pneg %p51
        $region66: #{tpu_custom_call.1} parent=63 // pred_check_branch
          %401 = sbr.rel (%p399) target = $region68
        $region67: #{tpu_custom_call.1} parent=63 // pred_region
          %402 = dma.done %s395, 512
        $region68: #{tpu_custom_call.1} parent=63 // pred_fallthru
          _
        // Predicated region
        $region69: #{tpu_custom_call.1} parent=63 // pred_check
          %p403 = pneg %p72
        $region70: #{tpu_custom_call.1} parent=63 // pred_check_branch
          %405 = sbr.rel (%p403) target = $region72
        $region71: #{tpu_custom_call.1} parent=63 // pred_region
          %406 = dma.done [#allocation6], 4096
        $region72: #{tpu_custom_call.1} parent=63 // pred_fallthru
          _
        // Predicated region
        $region73: #{tpu_custom_call.1} parent=63 // pred_check
          %p407 = pneg %p156
        $region74: #{tpu_custom_call.1} parent=63 // pred_check_branch
          %409 = sbr.rel (%p407) target = $region76
        $region75: #{tpu_custom_call.1} parent=63 // pred_region
          %410 = dma.done [#allocation6], 4096
        $region76: #{tpu_custom_call.1} parent=63 // pred_fallthru
          _
        // Predicated region
        $region77: #{tpu_custom_call.1} parent=63 // pred_check
          %p411 = pneg %p177
        $region78: #{tpu_custom_call.1} parent=63 // pred_check_branch
          %413 = sbr.rel (%p411) target = $region80
        $region79: #{tpu_custom_call.1} parent=63 // pred_region
          %414 = dma.done [#allocation9], 512
        $region80: #{tpu_custom_call.1} parent=63 // pred_fallthru
          _
        %s415 = sand.u32 %s38, 1
        %s416 = scalar_lea.sflag [#allocation3], %s415
        %s417 = sand.u32 %s38, 1
        %s418 = smul.addr %s417, 32
        %s419 = scalar_lea.vmem [#allocation2], %s418
        %p420 = pneg %p51
        %p421 = pneg %p48
        %p422 = pneg %p72
        %p423 = pneg %p69
        %p424 = pneg %p93
        %p425 = pneg %p90
        %p426 = pneg %p114
        %p427 = pneg %p111
        %p428 = pneg %p135
        %p429 = pneg %p132
        %p430 = pneg %p156
        %p431 = pneg %p153
        %p432 = pneg %p177
        %p433 = pneg %p174
        %p434 = pneg %p198
        %p435 = pneg %p195
        %p436 = pneg %p219
        %p437 = pneg %p216
        %p438 = pneg %p240
        %p439 = pneg %p237
        %p440 = pneg %p261
        %p441 = pneg %p258
        %p442 = pneg %p287
        %p443 = pneg %p284
        %s444 = sand.u32 %s274, 1
        %s445 = scalar_lea.sflag [#allocation4], %s444
        %s446 = sand.u32 %s274, 1
        %s447 = smul.addr %s446, 16
        %s448 = scalar_lea.vmem [#allocation10], %s447
        %v450 = vld [vmem:[%s398] sm:$0xff]
        %v451 = vld [vmem:[%s398 + $0x8] sm:$0xff]
        %v452 = vld [vmem:[%s398 + $0x10] sm:$0xff]
        %v453 = vld [vmem:[%s398 + $0x18] sm:$0xff]
        %v454 = vpack.c.bf16 %v452, %v450
        %v455 = vpack.c.bf16 %v453, %v451
        %v456 = vld [vmem:[#allocation5] sm:$0xff]
        %v457 = vld [vmem:[#allocation5 + $0x8] sm:$0xff]
        %v458 = vld [vmem:[#allocation5 + $0x10] sm:$0xff]
        %v459 = vld [vmem:[#allocation5 + $0x18] sm:$0xff]
        %v460 = vld [vmem:[#allocation5 + $0x20] sm:$0xff]
        %v461 = vld [vmem:[#allocation5 + $0x28] sm:$0xff]
        %v462 = vld [vmem:[#allocation5 + $0x30] sm:$0xff]
        %v463 = vld [vmem:[#allocation5 + $0x38] sm:$0xff]
        %v464 = vld [vmem:[#allocation5 + $0x40] sm:$0xff]
        %v465 = vld [vmem:[#allocation5 + $0x48] sm:$0xff]
        %v466 = vld [vmem:[#allocation5 + $0x50] sm:$0xff]
        %v467 = vld [vmem:[#allocation5 + $0x58] sm:$0xff]
        %v468 = vld [vmem:[#allocation5 + $0x60] sm:$0xff]
        %v469 = vld [vmem:[#allocation5 + $0x68] sm:$0xff]
        %v470 = vld [vmem:[#allocation5 + $0x70] sm:$0xff]
        %v471 = vld [vmem:[#allocation5 + $0x78] sm:$0xff]
        %v472 = vld [vmem:[#allocation5 + $0x80] sm:$0xff]
        %v473 = vld [vmem:[#allocation5 + $0x88] sm:$0xff]
        %v474 = vld [vmem:[#allocation5 + $0x90] sm:$0xff]
        %v475 = vld [vmem:[#allocation5 + $0x98] sm:$0xff]
        %v476 = vld [vmem:[#allocation5 + $0xa0] sm:$0xff]
        %v477 = vld [vmem:[#allocation5 + $0xa8] sm:$0xff]
        %v478 = vld [vmem:[#allocation5 + $0xb0] sm:$0xff]
        %v479 = vld [vmem:[#allocation5 + $0xb8] sm:$0xff]
        %v480 = vld [vmem:[#allocation5 + $0xc0] sm:$0xff]
        %v481 = vld [vmem:[#allocation5 + $0xc8] sm:$0xff]
        %v482 = vld [vmem:[#allocation5 + $0xd0] sm:$0xff]
        %v483 = vld [vmem:[#allocation5 + $0xd8] sm:$0xff]
        %v484 = vld [vmem:[#allocation5 + $0xe0] sm:$0xff]
        %v485 = vld [vmem:[#allocation5 + $0xe8] sm:$0xff]
        %v486 = vld [vmem:[#allocation5 + $0xf0] sm:$0xff]
        %v487 = vld [vmem:[#allocation5 + $0xf8] sm:$0xff]
        %v520 = vunpack.c.l.b16 %v456
        %v521 = vunpack.c.h.b16 %v456
        %v522 = vunpack.c.l.b16 %v457
        %v523 = vunpack.c.h.b16 %v457
        %v524 = vunpack.c.l.b16 %v458
        %v525 = vunpack.c.h.b16 %v458
        %v526 = vunpack.c.l.b16 %v459
        %v527 = vunpack.c.h.b16 %v459
        %v528 = vunpack.c.l.b16 %v460
        %v529 = vunpack.c.h.b16 %v460
        %v530 = vunpack.c.l.b16 %v461
        %v531 = vunpack.c.h.b16 %v461
        %v532 = vunpack.c.l.b16 %v462
        %v533 = vunpack.c.h.b16 %v462
        %v534 = vunpack.c.l.b16 %v463
        %v535 = vunpack.c.h.b16 %v463
        %v536 = vunpack.c.l.b16 %v464
        %v537 = vunpack.c.h.b16 %v464
        %v538 = vunpack.c.l.b16 %v465
        %v539 = vunpack.c.h.b16 %v465
        %v540 = vunpack.c.l.b16 %v466
        %v541 = vunpack.c.h.b16 %v466
        %v542 = vunpack.c.l.b16 %v467
        %v543 = vunpack.c.h.b16 %v467
        %v544 = vunpack.c.l.b16 %v468
        %v545 = vunpack.c.h.b16 %v468
        %v546 = vunpack.c.l.b16 %v469
        %v547 = vunpack.c.h.b16 %v469
        %v548 = vunpack.c.l.b16 %v470
        %v549 = vunpack.c.h.b16 %v470
        %v550 = vunpack.c.l.b16 %v471
        %v551 = vunpack.c.h.b16 %v471
        %v552 = vunpack.c.l.b16 %v472
        %v553 = vunpack.c.h.b16 %v472
        %v554 = vunpack.c.l.b16 %v473
        %v555 = vunpack.c.h.b16 %v473
        %v556 = vunpack.c.l.b16 %v474
        %v557 = vunpack.c.h.b16 %v474
        %v558 = vunpack.c.l.b16 %v475
        %v559 = vunpack.c.h.b16 %v475
        %v560 = vunpack.c.l.b16 %v476
        %v561 = vunpack.c.h.b16 %v476
        %v562 = vunpack.c.l.b16 %v477
        %v563 = vunpack.c.h.b16 %v477
        %v564 = vunpack.c.l.b16 %v478
        %v565 = vunpack.c.h.b16 %v478
        %v566 = vunpack.c.l.b16 %v479
        %v567 = vunpack.c.h.b16 %v479
        %v568 = vunpack.c.l.b16 %v480
        %v569 = vunpack.c.h.b16 %v480
        %v570 = vunpack.c.l.b16 %v481
        %v571 = vunpack.c.h.b16 %v481
        %v572 = vunpack.c.l.b16 %v482
        %v573 = vunpack.c.h.b16 %v482
        %v574 = vunpack.c.l.b16 %v483
        %v575 = vunpack.c.h.b16 %v483
        %v576 = vunpack.c.l.b16 %v484
        %v577 = vunpack.c.h.b16 %v484
        %v578 = vunpack.c.l.b16 %v485
        %v579 = vunpack.c.h.b16 %v485
        %v580 = vunpack.c.l.b16 %v486
        %v581 = vunpack.c.h.b16 %v486
        %v582 = vunpack.c.l.b16 %v487
        %v583 = vunpack.c.h.b16 %v487
        %v584 = vpack.c.b16 %v522, %v520
        %v585 = vpack.c.b16 %v523, %v521
        %v586 = vpack.c.b16 %v526, %v524
        %v587 = vpack.c.b16 %v527, %v525
        %v588 = vpack.c.b16 %v530, %v528
        %v589 = vpack.c.b16 %v531, %v529
        %v590 = vpack.c.b16 %v534, %v532
        %v591 = vpack.c.b16 %v535, %v533
        %v592 = vpack.c.b16 %v538, %v536
        %v593 = vpack.c.b16 %v539, %v537
        %v594 = vpack.c.b16 %v542, %v540
        %v595 = vpack.c.b16 %v543, %v541
        %v596 = vpack.c.b16 %v546, %v544
        %v597 = vpack.c.b16 %v547, %v545
        %v598 = vpack.c.b16 %v550, %v548
        %v599 = vpack.c.b16 %v551, %v549
        %v600 = vpack.c.b16 %v554, %v552
        %v601 = vpack.c.b16 %v555, %v553
        %v602 = vpack.c.b16 %v558, %v556
        %v603 = vpack.c.b16 %v559, %v557
        %v604 = vpack.c.b16 %v562, %v560
        %v605 = vpack.c.b16 %v563, %v561
        %v606 = vpack.c.b16 %v566, %v564
        %v607 = vpack.c.b16 %v567, %v565
        %v608 = vpack.c.b16 %v570, %v568
        %v609 = vpack.c.b16 %v571, %v569
        %v610 = vpack.c.b16 %v574, %v572
        %v611 = vpack.c.b16 %v575, %v573
        %v612 = vpack.c.b16 %v578, %v576
        %v613 = vpack.c.b16 %v579, %v577
        %v614 = vpack.c.b16 %v582, %v580
        %v615 = vpack.c.b16 %v583, %v581
        %648 = vmatprep.subr.bf16.mxu0 %v599
        %649 = vmatpush1.bf16.msra.mxu0 %v598
        %650 = vmatprep.subr.bf16.mxu0 %v597
        %651 = vmatpush1.bf16.msra.mxu0 %v596
        %652 = vmatprep.subr.bf16.mxu0 %v595
        %653 = vmatpush1.bf16.msra.mxu0 %v594
        %654 = vmatprep.subr.bf16.mxu0 %v593
        %655 = vmatpush1.bf16.msra.mxu0 %v592
        %656 = vmatprep.subr.bf16.mxu0 %v591
        %657 = vmatpush1.bf16.msra.mxu0 %v590
        %658 = vmatprep.subr.bf16.mxu0 %v589
        %659 = vmatpush1.bf16.msra.mxu0 %v588
        %660 = vmatprep.subr.bf16.mxu0 %v587
        %661 = vmatpush1.bf16.msra.mxu0 %v586
        %662 = vmatprep.subr.bf16.mxu0 %v585
        %663 = vmatpush1.bf16.msra.mxu0 %v584
        %664 = vmatprep.subr.bf16.mxu0 %v615
        %665 = vmatpush2.bf16.msra.mxu0 %v614
        %666 = vmatprep.subr.bf16.mxu0 %v613
        %667 = vmatpush2.bf16.msra.mxu0 %v612
        %668 = vmatprep.subr.bf16.mxu0 %v611
        %669 = vmatpush2.bf16.msra.mxu0 %v610
        %670 = vmatprep.subr.bf16.mxu0 %v609
        %671 = vmatpush2.bf16.msra.mxu0 %v608
        %672 = vmatprep.subr.bf16.mxu0 %v607
        %673 = vmatpush2.bf16.msra.mxu0 %v606
        %674 = vmatprep.subr.bf16.mxu0 %v605
        %675 = vmatpush2.bf16.msra.mxu0 %v604
        %676 = vmatprep.subr.bf16.mxu0 %v603
        %677 = vmatpush2.bf16.msra.mxu0 %v602
        %678 = vmatprep.subr.bf16.mxu0 %v601
        %679 = vmatpush2.bf16.msra.mxu0 %v600
        %680 = vmatprep.mubr.bf16.mxu0 %v455
        %681 = vmatmul.mubr.bf16.gmra.mxu0 %v454
        %v682 = vpop.f32.mrf.mxu0
        %v683 = vadd.f32 0.0, %v682
        %v684 = vpop.f32.mrf.mxu0
        %v685 = vadd.f32 0.0, %v684
        %v686 = vpop.f32.mrf.mxu0
        %v687 = vadd.f32 0.0, %v686
        %v688 = vpop.f32.mrf.mxu0
        %v689 = vadd.f32 0.0, %v688
        %690 = vdwg.mxu0
        %v691 = vld [vmem:[%s2] sm:$0xf]
        %v692 = vld [vmem:[%s2 + $0x4] sm:$0xf]
        %v693 = vpack.c.bf16 %v687, %v683
        %v694 = vpack.c.bf16 %v689, %v685
        %v695 = vld [vmem:[%s3] sm:$0xff]
        %v696 = vld [vmem:[%s3 + $0x8] sm:$0xff]
        %698 = vset.pattern.permute.xlu0 0
        %699 = vperm.xlu0 %698, %v695
        %v700 = vpop.permute.xlu0 %699
        %703 = vset.pattern.permute.xlu0 0
        %704 = vperm.xlu0 %703, %v696
        %v705 = vpop.permute.xlu0 %704
        %v709 = vunpack.c.l.b16 %v691
        %v710 = vunpack.c.l.b16 %v692
        %v711 = vpack.c.b16 %v710, %v709
        %vm712 = vcmask 130048
        %v714 = vsel %vm712, %v711, 0
        %716 = vmatprep.subr.bf16.mxu0 0
        %717 = vmatpush1.bf16.msra.mxu0 0
        %718 = vmatprep.subr.bf16.mxu0 0
        %719 = vmatpush1.bf16.msra.mxu0 0
        %720 = vmatprep.subr.bf16.mxu0 0
        %721 = vmatpush1.bf16.msra.mxu0 0
        %722 = vmatprep.subr.bf16.mxu0 0
        %723 = vmatpush1.bf16.msra.mxu0 0
        %724 = vmatprep.subr.bf16.mxu0 0
        %725 = vmatpush1.bf16.msra.mxu0 0
        %726 = vmatprep.subr.bf16.mxu0 0
        %727 = vmatpush1.bf16.msra.mxu0 0
        %728 = vmatprep.subr.bf16.mxu0 0
        %729 = vmatpush1.bf16.msra.mxu0 0
        %730 = vmatprep.subr.bf16.mxu0 %v694
        %731 = vmatpush1.bf16.msra.mxu0 %v693
        %732 = vmatprep.subr.bf16.mxu0 0
        %733 = vmatpush2.bf16.msra.mxu0 0
        %734 = vmatprep.subr.bf16.mxu0 0
        %735 = vmatpush2.bf16.msra.mxu0 0
        %736 = vmatprep.subr.bf16.mxu0 0
        %737 = vmatpush2.bf16.msra.mxu0 0
        %738 = vmatprep.subr.bf16.mxu0 0
        %739 = vmatpush2.bf16.msra.mxu0 0
        %740 = vmatprep.subr.bf16.mxu0 0
        %741 = vmatpush2.bf16.msra.mxu0 0
        %742 = vmatprep.subr.bf16.mxu0 0
        %743 = vmatpush2.bf16.msra.mxu0 0
        %744 = vmatprep.subr.bf16.mxu0 0
        %745 = vmatpush2.bf16.msra.mxu0 0
        %746 = vmatprep.subr.bf16.mxu0 0
        %747 = vmatpush2.bf16.msra.mxu0 0
        %748 = vmatprep.mubr.bf16.mxu0 0
        %749 = vmatmul.mubr.bf16.gmra.mxu0 %v714
        %v750 = vpop.f32.mrf.mxu0
        %v751 = vadd.f32 %v700, %v750
        %v752 = vpop.f32.mrf.mxu0
        %v753 = vadd.f32 %v700, %v752
        %v754 = vpop.f32.mrf.mxu0
        %v755 = vadd.f32 %v705, %v754
        %v756 = vpop.f32.mrf.mxu0
        %v757 = vadd.f32 %v705, %v756
        %758 = vdwg.mxu0
        %v759 = vmax.f32 %v751, 0.0
        %v760 = vmax.f32 %v753, 0.0
        %v761 = vmax.f32 %v755, 0.0
        %v762 = vmax.f32 %v757, 0.0
        %v763 = vld [vmem:[%s4] sm:$0xff]
        %v764 = vld [vmem:[%s4 + $0x8] sm:$0xff]
        %v765 = vld [vmem:[%s4 + $0x10] sm:$0xff]
        %v766 = vld [vmem:[%s4 + $0x18] sm:$0xff]
        %v767 = vmul.f32 %v759, %v763
        %v768 = vmul.f32 %v760, %v764
        %v769 = vmul.f32 %v761, %v765
        %v770 = vmul.f32 %v762, %v766
        %v771 = vpack.c.bf16 %v769, %v767
        %v772 = vpack.c.bf16 %v770, %v768
        %v773 = vld [vmem:[#allocation7] sm:$0xff]
        %v774 = vld [vmem:[#allocation7 + $0x8] sm:$0xff]
        %v775 = vld [vmem:[#allocation7 + $0x10] sm:$0xff]
        %v776 = vld [vmem:[#allocation7 + $0x18] sm:$0xff]
        %v777 = vld [vmem:[#allocation7 + $0x20] sm:$0xff]
        %v778 = vld [vmem:[#allocation7 + $0x28] sm:$0xff]
        %v779 = vld [vmem:[#allocation7 + $0x30] sm:$0xff]
        %v780 = vld [vmem:[#allocation7 + $0x38] sm:$0xff]
        %v781 = vld [vmem:[#allocation7 + $0x40] sm:$0xff]
        %v782 = vld [vmem:[#allocation7 + $0x48] sm:$0xff]
        %v783 = vld [vmem:[#allocation7 + $0x50] sm:$0xff]
        %v784 = vld [vmem:[#allocation7 + $0x58] sm:$0xff]
        %v785 = vld [vmem:[#allocation7 + $0x60] sm:$0xff]
        %v786 = vld [vmem:[#allocation7 + $0x68] sm:$0xff]
        %v787 = vld [vmem:[#allocation7 + $0x70] sm:$0xff]
        %v788 = vld [vmem:[#allocation7 + $0x78] sm:$0xff]
        %v789 = vld [vmem:[#allocation7 + $0x80] sm:$0xff]
        %v790 = vld [vmem:[#allocation7 + $0x88] sm:$0xff]
        %v791 = vld [vmem:[#allocation7 + $0x90] sm:$0xff]
        %v792 = vld [vmem:[#allocation7 + $0x98] sm:$0xff]
        %v793 = vld [vmem:[#allocation7 + $0xa0] sm:$0xff]
        %v794 = vld [vmem:[#allocation7 + $0xa8] sm:$0xff]
        %v795 = vld [vmem:[#allocation7 + $0xb0] sm:$0xff]
        %v796 = vld [vmem:[#allocation7 + $0xb8] sm:$0xff]
        %v797 = vld [vmem:[#allocation7 + $0xc0] sm:$0xff]
        %v798 = vld [vmem:[#allocation7 + $0xc8] sm:$0xff]
        %v799 = vld [vmem:[#allocation7 + $0xd0] sm:$0xff]
        %v800 = vld [vmem:[#allocation7 + $0xd8] sm:$0xff]
        %v801 = vld [vmem:[#allocation7 + $0xe0] sm:$0xff]
        %v802 = vld [vmem:[#allocation7 + $0xe8] sm:$0xff]
        %v803 = vld [vmem:[#allocation7 + $0xf0] sm:$0xff]
        %v804 = vld [vmem:[#allocation7 + $0xf8] sm:$0xff]
        %v837 = vunpack.c.l.b16 %v773
        %v838 = vunpack.c.h.b16 %v773
        %v839 = vunpack.c.l.b16 %v774
        %v840 = vunpack.c.h.b16 %v774
        %v841 = vunpack.c.l.b16 %v775
        %v842 = vunpack.c.h.b16 %v775
        %v843 = vunpack.c.l.b16 %v776
        %v844 = vunpack.c.h.b16 %v776
        %v845 = vunpack.c.l.b16 %v777
        %v846 = vunpack.c.h.b16 %v777
        %v847 = vunpack.c.l.b16 %v778
        %v848 = vunpack.c.h.b16 %v778
        %v849 = vunpack.c.l.b16 %v779
        %v850 = vunpack.c.h.b16 %v779
        %v851 = vunpack.c.l.b16 %v780
        %v852 = vunpack.c.h.b16 %v780
        %v853 = vunpack.c.l.b16 %v781
        %v854 = vunpack.c.h.b16 %v781
        %v855 = vunpack.c.l.b16 %v782
        %v856 = vunpack.c.h.b16 %v782
        %v857 = vunpack.c.l.b16 %v783
        %v858 = vunpack.c.h.b16 %v783
        %v859 = vunpack.c.l.b16 %v784
        %v860 = vunpack.c.h.b16 %v784
        %v861 = vunpack.c.l.b16 %v785
        %v862 = vunpack.c.h.b16 %v785
        %v863 = vunpack.c.l.b16 %v786
        %v864 = vunpack.c.h.b16 %v786
        %v865 = vunpack.c.l.b16 %v787
        %v866 = vunpack.c.h.b16 %v787
        %v867 = vunpack.c.l.b16 %v788
        %v868 = vunpack.c.h.b16 %v788
        %v869 = vunpack.c.l.b16 %v789
        %v870 = vunpack.c.h.b16 %v789
        %v871 = vunpack.c.l.b16 %v790
        %v872 = vunpack.c.h.b16 %v790
        %v873 = vunpack.c.l.b16 %v791
        %v874 = vunpack.c.h.b16 %v791
        %v875 = vunpack.c.l.b16 %v792
        %v876 = vunpack.c.h.b16 %v792
        %v877 = vunpack.c.l.b16 %v793
        %v878 = vunpack.c.h.b16 %v793
        %v879 = vunpack.c.l.b16 %v794
        %v880 = vunpack.c.h.b16 %v794
        %v881 = vunpack.c.l.b16 %v795
        %v882 = vunpack.c.h.b16 %v795
        %v883 = vunpack.c.l.b16 %v796
        %v884 = vunpack.c.h.b16 %v796
        %v885 = vunpack.c.l.b16 %v797
        %v886 = vunpack.c.h.b16 %v797
        %v887 = vunpack.c.l.b16 %v798
        %v888 = vunpack.c.h.b16 %v798
        %v889 = vunpack.c.l.b16 %v799
        %v890 = vunpack.c.h.b16 %v799
        %v891 = vunpack.c.l.b16 %v800
        %v892 = vunpack.c.h.b16 %v800
        %v893 = vunpack.c.l.b16 %v801
        %v894 = vunpack.c.h.b16 %v801
        %v895 = vunpack.c.l.b16 %v802
        %v896 = vunpack.c.h.b16 %v802
        %v897 = vunpack.c.l.b16 %v803
        %v898 = vunpack.c.h.b16 %v803
        %v899 = vunpack.c.l.b16 %v804
        %v900 = vunpack.c.h.b16 %v804
        %v901 = vpack.c.b16 %v839, %v837
        %v902 = vpack.c.b16 %v840, %v838
        %v903 = vpack.c.b16 %v843, %v841
        %v904 = vpack.c.b16 %v844, %v842
        %v905 = vpack.c.b16 %v847, %v845
        %v906 = vpack.c.b16 %v848, %v846
        %v907 = vpack.c.b16 %v851, %v849
        %v908 = vpack.c.b16 %v852, %v850
        %v909 = vpack.c.b16 %v855, %v853
        %v910 = vpack.c.b16 %v856, %v854
        %v911 = vpack.c.b16 %v859, %v857
        %v912 = vpack.c.b16 %v860, %v858
        %v913 = vpack.c.b16 %v863, %v861
        %v914 = vpack.c.b16 %v864, %v862
        %v915 = vpack.c.b16 %v867, %v865
        %v916 = vpack.c.b16 %v868, %v866
        %v917 = vpack.c.b16 %v871, %v869
        %v918 = vpack.c.b16 %v872, %v870
        %v919 = vpack.c.b16 %v875, %v873
        %v920 = vpack.c.b16 %v876, %v874
        %v921 = vpack.c.b16 %v879, %v877
        %v922 = vpack.c.b16 %v880, %v878
        %v923 = vpack.c.b16 %v883, %v881
        %v924 = vpack.c.b16 %v884, %v882
        %v925 = vpack.c.b16 %v887, %v885
        %v926 = vpack.c.b16 %v888, %v886
        %v927 = vpack.c.b16 %v891, %v889
        %v928 = vpack.c.b16 %v892, %v890
        %v929 = vpack.c.b16 %v895, %v893
        %v930 = vpack.c.b16 %v896, %v894
        %v931 = vpack.c.b16 %v899, %v897
        %v932 = vpack.c.b16 %v900, %v898
        %965 = vmatprep.subr.bf16.mxu0 %v916
        %966 = vmatpush1.bf16.msra.mxu0 %v915
        %967 = vmatprep.subr.bf16.mxu0 %v914
        %968 = vmatpush1.bf16.msra.mxu0 %v913
        %969 = vmatprep.subr.bf16.mxu0 %v912
        %970 = vmatpush1.bf16.msra.mxu0 %v911
        %971 = vmatprep.subr.bf16.mxu0 %v910
        %972 = vmatpush1.bf16.msra.mxu0 %v909
        %973 = vmatprep.subr.bf16.mxu0 %v908
        %974 = vmatpush1.bf16.msra.mxu0 %v907
        %975 = vmatprep.subr.bf16.mxu0 %v906
        %976 = vmatpush1.bf16.msra.mxu0 %v905
        %977 = vmatprep.subr.bf16.mxu0 %v904
        %978 = vmatpush1.bf16.msra.mxu0 %v903
        %979 = vmatprep.subr.bf16.mxu0 %v902
        %980 = vmatpush1.bf16.msra.mxu0 %v901
        %981 = vmatprep.subr.bf16.mxu0 %v932
        %982 = vmatpush2.bf16.msra.mxu0 %v931
        %983 = vmatprep.subr.bf16.mxu0 %v930
        %984 = vmatpush2.bf16.msra.mxu0 %v929
        %985 = vmatprep.subr.bf16.mxu0 %v928
        %986 = vmatpush2.bf16.msra.mxu0 %v927
        %987 = vmatprep.subr.bf16.mxu0 %v926
        %988 = vmatpush2.bf16.msra.mxu0 %v925
        %989 = vmatprep.subr.bf16.mxu0 %v924
        %990 = vmatpush2.bf16.msra.mxu0 %v923
        %991 = vmatprep.subr.bf16.mxu0 %v922
        %992 = vmatpush2.bf16.msra.mxu0 %v921
        %993 = vmatprep.subr.bf16.mxu0 %v920
        %994 = vmatpush2.bf16.msra.mxu0 %v919
        %995 = vmatprep.subr.bf16.mxu0 %v918
        %996 = vmatpush2.bf16.msra.mxu0 %v917
        %997 = vmatprep.mubr.bf16.mxu0 %v772
        %998 = vmatmul.mubr.bf16.gmra.mxu0 %v771
        %v999 = vpop.f32.mrf.mxu0
        %v1000 = vadd.f32 0.0, %v999
        %v1001 = vpop.f32.mrf.mxu0
        %v1002 = vadd.f32 0.0, %v1001
        %v1003 = vpop.f32.mrf.mxu0
        %v1004 = vadd.f32 0.0, %v1003
        %v1005 = vpop.f32.mrf.mxu0
        %v1006 = vadd.f32 0.0, %v1005
        %1007 = vdwg.mxu0
        %v1008 = vld [vmem:[#allocation8] sm:$0xff]
        %v1009 = vld [vmem:[#allocation8 + $0x8] sm:$0xff]
        %v1010 = vld [vmem:[#allocation8 + $0x10] sm:$0x1]
        %v1011 = vld [vmem:[#allocation8 + $0x18] sm:$0x1]
        %1012 = vrot.lane.b32.xlu0 %v450, 17
        %v1013 = vpop.permute.xlu0 %1012
        %1014 = vrot.lane.b32.xlu0 %v452, 17
        %v1015 = vpop.permute.xlu0 %1014
        %1016 = vrot.lane.b32.xlu0 %v1000, 17
        %v1017 = vpop.permute.xlu0 %1016
        %1018 = vrot.lane.b32.xlu0 %v1004, 17
        %v1019 = vpop.permute.xlu0 %1018
        %1020 = vrot.lane.b32.xlu0 %v451, 17
        %v1021 = vpop.permute.xlu0 %1020
        %1022 = vrot.lane.b32.xlu0 %v453, 17
        %v1023 = vpop.permute.xlu0 %1022
        %1024 = vrot.lane.b32.xlu0 %v1002, 17
        %v1025 = vpop.permute.xlu0 %1024
        %1026 = vrot.lane.b32.xlu0 %v1006, 17
        %v1027 = vpop.permute.xlu0 %1026
        %v1028 = vlaneseq
        %v1029 = vand.u32 %v1028, 127
        %vm1030 = vcmp.lt.s32.totalorder %v1029, 17
        %v1031 = vsel %vm1030, %v1013, %v1021
        %v1032 = vsel %vm1030, %v1015, %v1023
        %v1033 = vsel %vm1030, %v1017, %v1025
        %v1034 = vsel %vm1030, %v1019, %v1027
        %v1035 = vsel %vm1030, %v1021, %v1013
        %v1036 = vsel %vm1030, %v1023, %v1015
        %v1037 = vsel %vm1030, %v1025, %v1017
        %v1038 = vsel %vm1030, %v1027, %v1019
        %v1039 = vlaneseq
        %v1040 = vshrl.u32 %v1039, 7
        %v1041 = vsub.s32 0, %v1040
        %v1042 = vrot.slane %v1008, %v1041
        %v1043 = vlaneseq
        %v1044 = vshrl.u32 %v1043, 7
        %v1045 = vsub.s32 0, %v1044
        %v1046 = vrot.slane %v1009, %v1045
        %v1047 = vmul.f32 %v1035, %v1042
        %v1048 = vmul.f32 %v1031, %v1046
        %v1049 = vmul.f32 %v1036, %v1042
        %v1050 = vmul.f32 %v1032, %v1046
        %v1051 = vmul.f32 %v1037, %v1042
        %v1052 = vmul.f32 %v1033, %v1046
        %v1053 = vmul.f32 %v1038, %v1042
        %v1054 = vmul.f32 %v1034, %v1046
        %v1055 = vpack.c.bf16 %v1049, %v1047
        %v1056 = vpack.c.bf16 %v1050, %v1048
        %v1057 = vpack.c.bf16 %v1053, %v1051
        %v1058 = vpack.c.bf16 %v1054, %v1052
        %1059 = vrot.lane.b32.xlu0 %v450, 16
        %v1060 = vpop.permute.xlu0 %1059
        %1061 = vrot.lane.b32.xlu0 %v452, 16
        %v1062 = vpop.permute.xlu0 %1061
        %1063 = vrot.lane.b32.xlu0 %v1000, 16
        %v1064 = vpop.permute.xlu0 %1063
        %1065 = vrot.lane.b32.xlu0 %v1004, 16
        %v1066 = vpop.permute.xlu0 %1065
        %1067 = vrot.lane.b32.xlu0 %v451, 16
        %v1068 = vpop.permute.xlu0 %1067
        %1069 = vrot.lane.b32.xlu0 %v453, 16
        %v1070 = vpop.permute.xlu0 %1069
        %1071 = vrot.lane.b32.xlu0 %v1002, 16
        %v1072 = vpop.permute.xlu0 %1071
        %1073 = vrot.lane.b32.xlu0 %v1006, 16
        %v1074 = vpop.permute.xlu0 %1073
        %vm1075 = vcmp.lt.s32.totalorder %v1029, 16
        %v1076 = vsel %vm1075, %v1060, %v1068
        %v1077 = vsel %vm1075, %v1062, %v1070
        %v1078 = vsel %vm1075, %v1064, %v1072
        %v1079 = vsel %vm1075, %v1066, %v1074
        %v1080 = vsel %vm1075, %v1068, %v1060
        %v1081 = vsel %vm1075, %v1070, %v1062
        %v1082 = vsel %vm1075, %v1072, %v1064
        %v1083 = vsel %vm1075, %v1074, %v1066
        %v1084 = vlaneseq
        %v1085 = vshrl.u32 %v1084, 7
        %v1086 = vsub.s32 1, %v1085
        %v1087 = vrot.slane %v1008, %v1086
        %v1088 = vlaneseq
        %v1089 = vshrl.u32 %v1088, 7
        %v1090 = vsub.s32 1, %v1089
        %v1091 = vrot.slane %v1009, %v1090
        %v1092 = vmul.f32 %v1080, %v1087
        %v1093 = vmul.f32 %v1076, %v1091
        %v1094 = vmul.f32 %v1081, %v1087
        %v1095 = vmul.f32 %v1077, %v1091
        %v1096 = vmul.f32 %v1082, %v1087
        %v1097 = vmul.f32 %v1078, %v1091
        %v1098 = vmul.f32 %v1083, %v1087
        %v1099 = vmul.f32 %v1079, %v1091
        %v1100 = vpack.c.bf16 %v1094, %v1092
        %v1101 = vpack.c.bf16 %v1095, %v1093
        %v1102 = vpack.c.bf16 %v1098, %v1096
        %v1103 = vpack.c.bf16 %v1099, %v1097
        %1104 = vrot.lane.b32.xlu0 %v450, 15
        %v1105 = vpop.permute.xlu0 %1104
        %1106 = vrot.lane.b32.xlu0 %v452, 15
        %v1107 = vpop.permute.xlu0 %1106
        %1108 = vrot.lane.b32.xlu0 %v1000, 15
        %v1109 = vpop.permute.xlu0 %1108
        %1110 = vrot.lane.b32.xlu0 %v1004, 15
        %v1111 = vpop.permute.xlu0 %1110
        %1112 = vrot.lane.b32.xlu0 %v451, 15
        %v1113 = vpop.permute.xlu0 %1112
        %1114 = vrot.lane.b32.xlu0 %v453, 15
        %v1115 = vpop.permute.xlu0 %1114
        %1116 = vrot.lane.b32.xlu0 %v1002, 15
        %v1117 = vpop.permute.xlu0 %1116
        %1118 = vrot.lane.b32.xlu0 %v1006, 15
        %v1119 = vpop.permute.xlu0 %1118
        %vm1120 = vcmp.lt.s32.totalorder %v1029, 15
        %v1121 = vsel %vm1120, %v1105, %v1113
        %v1122 = vsel %vm1120, %v1107, %v1115
        %v1123 = vsel %vm1120, %v1109, %v1117
        %v1124 = vsel %vm1120, %v1111, %v1119
        %v1125 = vsel %vm1120, %v1113, %v1105
        %v1126 = vsel %vm1120, %v1115, %v1107
        %v1127 = vsel %vm1120, %v1117, %v1109
        %v1128 = vsel %vm1120, %v1119, %v1111
        %v1129 = vlaneseq
        %v1130 = vshrl.u32 %v1129, 7
        %v1131 = vsub.s32 2, %v1130
        %v1132 = vrot.slane %v1008, %v1131
        %v1133 = vlaneseq
        %v1134 = vshrl.u32 %v1133, 7
        %v1135 = vsub.s32 2, %v1134
        %v1136 = vrot.slane %v1009, %v1135
        %v1137 = vmul.f32 %v1125, %v1132
        %v1138 = vmul.f32 %v1121, %v1136
        %v1139 = vmul.f32 %v1126, %v1132
        %v1140 = vmul.f32 %v1122, %v1136
        %v1141 = vmul.f32 %v1127, %v1132
        %v1142 = vmul.f32 %v1123, %v1136
        %v1143 = vmul.f32 %v1128, %v1132
        %v1144 = vmul.f32 %v1124, %v1136
        %v1145 = vpack.c.bf16 %v1139, %v1137
        %v1146 = vpack.c.bf16 %v1140, %v1138
        %v1147 = vpack.c.bf16 %v1143, %v1141
        %v1148 = vpack.c.bf16 %v1144, %v1142
        %1149 = vrot.lane.b32.xlu0 %v450, 1
        %v1150 = vpop.permute.xlu0 %1149
        %1151 = vrot.lane.b32.xlu0 %v452, 1
        %v1152 = vpop.permute.xlu0 %1151
        %1153 = vrot.lane.b32.xlu0 %v1000, 1
        %v1154 = vpop.permute.xlu0 %1153
        %1155 = vrot.lane.b32.xlu0 %v1004, 1
        %v1156 = vpop.permute.xlu0 %1155
        %1157 = vrot.lane.b32.xlu0 %v451, 1
        %v1158 = vpop.permute.xlu0 %1157
        %1159 = vrot.lane.b32.xlu0 %v453, 1
        %v1160 = vpop.permute.xlu0 %1159
        %1161 = vrot.lane.b32.xlu0 %v1002, 1
        %v1162 = vpop.permute.xlu0 %1161
        %1163 = vrot.lane.b32.xlu0 %v1006, 1
        %v1164 = vpop.permute.xlu0 %1163
        %vm1165 = vcmp.lt.s32.totalorder %v1029, 1
        %v1166 = vsel %vm1165, %v1150, %v1158
        %v1167 = vsel %vm1165, %v1152, %v1160
        %v1168 = vsel %vm1165, %v1154, %v1162
        %v1169 = vsel %vm1165, %v1156, %v1164
        %v1170 = vsel %vm1165, %v1158, %v1150
        %v1171 = vsel %vm1165, %v1160, %v1152
        %v1172 = vsel %vm1165, %v1162, %v1154
        %v1173 = vsel %vm1165, %v1164, %v1156
        %v1174 = vlaneseq
        %v1175 = vshrl.u32 %v1174, 7
        %v1176 = vsub.s32 3, %v1175
        %v1177 = vrot.slane %v1008, %v1176
        %v1178 = vlaneseq
        %v1179 = vshrl.u32 %v1178, 7
        %v1180 = vsub.s32 3, %v1179
        %v1181 = vrot.slane %v1009, %v1180
        %v1182 = vmul.f32 %v1170, %v1177
        %v1183 = vmul.f32 %v1166, %v1181
        %v1184 = vmul.f32 %v1171, %v1177
        %v1185 = vmul.f32 %v1167, %v1181
        %v1186 = vmul.f32 %v1172, %v1177
        %v1187 = vmul.f32 %v1168, %v1181
        %v1188 = vmul.f32 %v1173, %v1177
        %v1189 = vmul.f32 %v1169, %v1181
        %v1190 = vpack.c.bf16 %v1184, %v1182
        %v1191 = vpack.c.bf16 %v1185, %v1183
        %v1192 = vpack.c.bf16 %v1188, %v1186
        %v1193 = vpack.c.bf16 %v1189, %v1187
        %v1194 = vpack.c.bf16 %v1004, %v1000
        %v1195 = vpack.c.bf16 %v1006, %v1002
        %1196 = vrot.lane.b32.xlu0 %v450, 127
        %v1197 = vpop.permute.xlu0 %1196
        %1198 = vrot.lane.b32.xlu0 %v452, 127
        %v1199 = vpop.permute.xlu0 %1198
        %1200 = vrot.lane.b32.xlu0 %v1000, 127
        %v1201 = vpop.permute.xlu0 %1200
        %1202 = vrot.lane.b32.xlu0 %v1004, 127
        %v1203 = vpop.permute.xlu0 %1202
        %1204 = vrot.lane.b32.xlu0 %v451, 127
        %v1205 = vpop.permute.xlu0 %1204
        %1206 = vrot.lane.b32.xlu0 %v453, 127
        %v1207 = vpop.permute.xlu0 %1206
        %1208 = vrot.lane.b32.xlu0 %v1002, 127
        %v1209 = vpop.permute.xlu0 %1208
        %1210 = vrot.lane.b32.xlu0 %v1006, 127
        %v1211 = vpop.permute.xlu0 %1210
        %vm1212 = vcmp.lt.s32.totalorder %v1029, 127
        %v1213 = vsel %vm1212, %v1197, %v1205
        %v1214 = vsel %vm1212, %v1199, %v1207
        %v1215 = vsel %vm1212, %v1201, %v1209
        %v1216 = vsel %vm1212, %v1203, %v1211
        %v1217 = vsel %vm1212, %v1205, %v1197
        %v1218 = vsel %vm1212, %v1207, %v1199
        %v1219 = vsel %vm1212, %v1209, %v1201
        %v1220 = vsel %vm1212, %v1211, %v1203
        %v1221 = vlaneseq
        %v1222 = vshrl.u32 %v1221, 7
        %v1223 = vsub.s32 5, %v1222
        %v1224 = vrot.slane %v1008, %v1223
        %v1225 = vlaneseq
        %v1226 = vshrl.u32 %v1225, 7
        %v1227 = vsub.s32 5, %v1226
        %v1228 = vrot.slane %v1009, %v1227
        %v1229 = vmul.f32 %v1213, %v1224
        %v1230 = vmul.f32 %v1217, %v1228
        %v1231 = vmul.f32 %v1214, %v1224
        %v1232 = vmul.f32 %v1218, %v1228
        %v1233 = vmul.f32 %v1215, %v1224
        %v1234 = vmul.f32 %v1219, %v1228
        %v1235 = vmul.f32 %v1216, %v1224
        %v1236 = vmul.f32 %v1220, %v1228
        %v1237 = vpack.c.bf16 %v1231, %v1229
        %v1238 = vpack.c.bf16 %v1232, %v1230
        %v1239 = vpack.c.bf16 %v1235, %v1233
        %v1240 = vpack.c.bf16 %v1236, %v1234
        %1241 = vrot.lane.b32.xlu0 %v450, 113
        %v1242 = vpop.permute.xlu0 %1241
        %1243 = vrot.lane.b32.xlu0 %v452, 113
        %v1244 = vpop.permute.xlu0 %1243
        %1245 = vrot.lane.b32.xlu0 %v1000, 113
        %v1246 = vpop.permute.xlu0 %1245
        %1247 = vrot.lane.b32.xlu0 %v1004, 113
        %v1248 = vpop.permute.xlu0 %1247
        %1249 = vrot.lane.b32.xlu0 %v451, 113
        %v1250 = vpop.permute.xlu0 %1249
        %1251 = vrot.lane.b32.xlu0 %v453, 113
        %v1252 = vpop.permute.xlu0 %1251
        %1253 = vrot.lane.b32.xlu0 %v1002, 113
        %v1254 = vpop.permute.xlu0 %1253
        %1255 = vrot.lane.b32.xlu0 %v1006, 113
        %v1256 = vpop.permute.xlu0 %1255
        %vm1257 = vcmp.lt.s32.totalorder %v1029, 113
        %v1258 = vsel %vm1257, %v1242, %v1250
        %v1259 = vsel %vm1257, %v1244, %v1252
        %v1260 = vsel %vm1257, %v1246, %v1254
        %v1261 = vsel %vm1257, %v1248, %v1256
        %v1262 = vsel %vm1257, %v1250, %v1242
        %v1263 = vsel %vm1257, %v1252, %v1244
        %v1264 = vsel %vm1257, %v1254, %v1246
        %v1265 = vsel %vm1257, %v1256, %v1248
        %v1266 = vlaneseq
        %v1267 = vshrl.u32 %v1266, 7
        %v1268 = vsub.s32 6, %v1267
        %v1269 = vrot.slane %v1008, %v1268
        %v1270 = vlaneseq
        %v1271 = vshrl.u32 %v1270, 7
        %v1272 = vsub.s32 6, %v1271
        %v1273 = vrot.slane %v1009, %v1272
        %v1274 = vmul.f32 %v1258, %v1269
        %v1275 = vmul.f32 %v1262, %v1273
        %v1276 = vmul.f32 %v1259, %v1269
        %v1277 = vmul.f32 %v1263, %v1273
        %v1278 = vmul.f32 %v1260, %v1269
        %v1279 = vmul.f32 %v1264, %v1273
        %v1280 = vmul.f32 %v1261, %v1269
        %v1281 = vmul.f32 %v1265, %v1273
        %v1282 = vpack.c.bf16 %v1276, %v1274
        %v1283 = vpack.c.bf16 %v1277, %v1275
        %v1284 = vpack.c.bf16 %v1280, %v1278
        %v1285 = vpack.c.bf16 %v1281, %v1279
        %1286 = vrot.lane.b32.xlu0 %v450, 112
        %v1287 = vpop.permute.xlu0 %1286
        %1288 = vrot.lane.b32.xlu0 %v452, 112
        %v1289 = vpop.permute.xlu0 %1288
        %1290 = vrot.lane.b32.xlu0 %v1000, 112
        %v1291 = vpop.permute.xlu0 %1290
        %1292 = vrot.lane.b32.xlu0 %v1004, 112
        %v1293 = vpop.permute.xlu0 %1292
        %1294 = vrot.lane.b32.xlu0 %v451, 112
        %v1295 = vpop.permute.xlu0 %1294
        %1296 = vrot.lane.b32.xlu0 %v453, 112
        %v1297 = vpop.permute.xlu0 %1296
        %1298 = vrot.lane.b32.xlu0 %v1002, 112
        %v1299 = vpop.permute.xlu0 %1298
        %1300 = vrot.lane.b32.xlu0 %v1006, 112
        %v1301 = vpop.permute.xlu0 %1300
        %vm1302 = vcmp.lt.s32.totalorder %v1029, 112
        %v1303 = vsel %vm1302, %v1287, %v1295
        %v1304 = vsel %vm1302, %v1289, %v1297
        %v1305 = vsel %vm1302, %v1291, %v1299
        %v1306 = vsel %vm1302, %v1293, %v1301
        %v1307 = vsel %vm1302, %v1295, %v1287
        %v1308 = vsel %vm1302, %v1297, %v1289
        %v1309 = vsel %vm1302, %v1299, %v1291
        %v1310 = vsel %vm1302, %v1301, %v1293
        %v1311 = vlaneseq
        %v1312 = vshrl.u32 %v1311, 7
        %v1313 = vsub.s32 7, %v1312
        %v1314 = vrot.slane %v1008, %v1313
        %v1315 = vlaneseq
        %v1316 = vshrl.u32 %v1315, 7
        %v1317 = vsub.s32 7, %v1316
        %v1318 = vrot.slane %v1009, %v1317
        %v1319 = vmul.f32 %v1303, %v1314
        %v1320 = vmul.f32 %v1307, %v1318
        %v1321 = vmul.f32 %v1304, %v1314
        %v1322 = vmul.f32 %v1308, %v1318
        %v1323 = vmul.f32 %v1305, %v1314
        %v1324 = vmul.f32 %v1309, %v1318
        %v1325 = vmul.f32 %v1306, %v1314
        %v1326 = vmul.f32 %v1310, %v1318
        %v1327 = vpack.c.bf16 %v1321, %v1319
        %v1328 = vpack.c.bf16 %v1322, %v1320
        %v1329 = vpack.c.bf16 %v1325, %v1323
        %v1330 = vpack.c.bf16 %v1326, %v1324
        %1331 = vrot.lane.b32.xlu0 %v450, 111
        %v1332 = vpop.permute.xlu0 %1331
        %1333 = vrot.lane.b32.xlu0 %v452, 111
        %v1334 = vpop.permute.xlu0 %1333
        %1335 = vrot.lane.b32.xlu0 %v1000, 111
        %v1336 = vpop.permute.xlu0 %1335
        %1337 = vrot.lane.b32.xlu0 %v1004, 111
        %v1338 = vpop.permute.xlu0 %1337
        %1339 = vrot.lane.b32.xlu0 %v451, 111
        %v1340 = vpop.permute.xlu0 %1339
        %1341 = vrot.lane.b32.xlu0 %v453, 111
        %v1342 = vpop.permute.xlu0 %1341
        %1343 = vrot.lane.b32.xlu0 %v1002, 111
        %v1344 = vpop.permute.xlu0 %1343
        %1345 = vrot.lane.b32.xlu0 %v1006, 111
        %v1346 = vpop.permute.xlu0 %1345
        %vm1347 = vcmp.lt.s32.totalorder %v1029, 111
        %v1348 = vsel %vm1347, %v1332, %v1340
        %v1349 = vsel %vm1347, %v1334, %v1342
        %v1350 = vsel %vm1347, %v1336, %v1344
        %v1351 = vsel %vm1347, %v1338, %v1346
        %v1352 = vsel %vm1347, %v1340, %v1332
        %v1353 = vsel %vm1347, %v1342, %v1334
        %v1354 = vsel %vm1347, %v1344, %v1336
        %v1355 = vsel %vm1347, %v1346, %v1338
        %v1356 = vlaneseq
        %v1357 = vshrl.u32 %v1356, 7
        %v1358 = vsub.s32 0, %v1357
        %v1359 = vrot.slane %v1010, %v1358
        %v1360 = vlaneseq
        %v1361 = vshrl.u32 %v1360, 7
        %v1362 = vsub.s32 0, %v1361
        %v1363 = vrot.slane %v1011, %v1362
        %v1364 = vmul.f32 %v1348, %v1359
        %v1365 = vmul.f32 %v1352, %v1363
        %v1366 = vmul.f32 %v1349, %v1359
        %v1367 = vmul.f32 %v1353, %v1363
        %v1368 = vmul.f32 %v1350, %v1359
        %v1369 = vmul.f32 %v1354, %v1363
        %v1370 = vmul.f32 %v1351, %v1359
        %v1371 = vmul.f32 %v1355, %v1363
        %v1372 = vpack.c.bf16 %v1366, %v1364
        %v1373 = vpack.c.bf16 %v1367, %v1365
        %v1374 = vpack.c.bf16 %v1370, %v1368
        %v1375 = vpack.c.bf16 %v1371, %v1369
        %v1376 = vld [vmem:[%s7] sm:$0x3f]
        %v1377 = vld [vmem:[%s8] sm:$0xf]
        %1379 = vset.pattern.permute.xlu0 0
        %1380 = vperm.xlu0 %1379, %v1377
        %v1381 = vpop.permute.xlu0 %1380
        %v1384 = vcombine.high %v1376, %v1376
        %v1386 = vunpack.c.l.s4 1983009808
        %v1387 = vunpack.c.0.s8 %v1386
        %v1388 = vlaneseq
        %v1389 = vshrl.u32 %v1388, 7
        %v1390 = vsub.s32 %v1387, %v1389
        %v1391 = vrot.slane %v1376, %v1390
        %v1393 = vunpack.c.l.s4 1983009808
        %v1394 = vunpack.c.0.s8 %v1393
        %v1395 = vlaneseq
        %v1396 = vshrl.u32 %v1395, 7
        %v1397 = vsub.s32 %v1394, %v1396
        %v1398 = vrot.slane %v1384, %v1397
        %v1399 = vcombine.high %v1391, %v1391
        %vm1402 = vcmask 261120
        %v1404 = vsel %vm1402, %v1398, 0
        %1406 = vmatprep.subr.bf16.mxu0 %v1193
        %1407 = vmatpush1.bf16.msra.mxu0 %v1192
        %1408 = vmatprep.subr.bf16.mxu0 %v1191
        %1409 = vmatpush1.bf16.msra.mxu0 %v1190
        %1410 = vmatprep.subr.bf16.mxu0 %v1148
        %1411 = vmatpush1.bf16.msra.mxu0 %v1147
        %1412 = vmatprep.subr.bf16.mxu0 %v1146
        %1413 = vmatpush1.bf16.msra.mxu0 %v1145
        %1414 = vmatprep.subr.bf16.mxu0 %v1103
        %1415 = vmatpush1.bf16.msra.mxu0 %v1102
        %1416 = vmatprep.subr.bf16.mxu0 %v1101
        %1417 = vmatpush1.bf16.msra.mxu0 %v1100
        %1418 = vmatprep.subr.bf16.mxu0 %v1058
        %1419 = vmatpush1.bf16.msra.mxu0 %v1057
        %1420 = vmatprep.subr.bf16.mxu0 %v1056
        %1421 = vmatpush1.bf16.msra.mxu0 %v1055
        %1422 = vmatprep.subr.bf16.mxu0 %v1330
        %1423 = vmatpush2.bf16.msra.mxu0 %v1329
        %1424 = vmatprep.subr.bf16.mxu0 %v1328
        %1425 = vmatpush2.bf16.msra.mxu0 %v1327
        %1426 = vmatprep.subr.bf16.mxu0 %v1285
        %1427 = vmatpush2.bf16.msra.mxu0 %v1284
        %1428 = vmatprep.subr.bf16.mxu0 %v1283
        %1429 = vmatpush2.bf16.msra.mxu0 %v1282
        %1430 = vmatprep.subr.bf16.mxu0 %v1240
        %1431 = vmatpush2.bf16.msra.mxu0 %v1239
        %1432 = vmatprep.subr.bf16.mxu0 %v1238
        %1433 = vmatpush2.bf16.msra.mxu0 %v1237
        %1434 = vmatprep.subr.bf16.mxu0 %v1195
        %1435 = vmatpush2.bf16.msra.mxu0 %v1194
        %1436 = vmatprep.subr.bf16.mxu0 %v455
        %1437 = vmatpush2.bf16.msra.mxu0 %v454
        %1438 = vmatprep.mubr.bf16.mxu0 %v1399
        %1439 = vmatmul.mubr.bf16.gmra.mxu0 %v1391
        %v1440 = vpop.f32.mrf.mxu0
        %v1441 = vadd.f32 %v1381, %v1440
        %v1442 = vpop.f32.mrf.mxu0
        %v1443 = vadd.f32 %v1381, %v1442
        %v1444 = vpop.f32.mrf.mxu0
        %v1445 = vpop.f32.mrf.mxu0
        %1446 = vdwg.mxu0
        %1447 = vmatprep.subr.bf16.mxu0 0
        %1448 = vmatpush1.bf16.msra.mxu0 0
        %1449 = vmatprep.subr.bf16.mxu0 0
        %1450 = vmatpush1.bf16.msra.mxu0 0
        %1451 = vmatprep.subr.bf16.mxu0 0
        %1452 = vmatpush1.bf16.msra.mxu0 0
        %1453 = vmatprep.subr.bf16.mxu0 0
        %1454 = vmatpush1.bf16.msra.mxu0 0
        %1455 = vmatprep.subr.bf16.mxu0 0
        %1456 = vmatpush1.bf16.msra.mxu0 0
        %1457 = vmatprep.subr.bf16.mxu0 0
        %1458 = vmatpush1.bf16.msra.mxu0 0
        %1459 = vmatprep.subr.bf16.mxu0 %v1375
        %1460 = vmatpush1.bf16.msra.mxu0 %v1374
        %1461 = vmatprep.subr.bf16.mxu0 %v1373
        %1462 = vmatpush1.bf16.msra.mxu0 %v1372
        %1463 = vmatprep.subr.bf16.mxu0 0
        %1464 = vmatpush2.bf16.msra.mxu0 0
        %1465 = vmatprep.subr.bf16.mxu0 0
        %1466 = vmatpush2.bf16.msra.mxu0 0
        %1467 = vmatprep.subr.bf16.mxu0 0
        %1468 = vmatpush2.bf16.msra.mxu0 0
        %1469 = vmatprep.subr.bf16.mxu0 0
        %1470 = vmatpush2.bf16.msra.mxu0 0
        %1471 = vmatprep.subr.bf16.mxu0 0
        %1472 = vmatpush2.bf16.msra.mxu0 0
        %1473 = vmatprep.subr.bf16.mxu0 0
        %1474 = vmatpush2.bf16.msra.mxu0 0
        %1475 = vmatprep.subr.bf16.mxu0 0
        %1476 = vmatpush2.bf16.msra.mxu0 0
        %1477 = vmatprep.subr.bf16.mxu0 0
        %1478 = vmatpush2.bf16.msra.mxu0 0
        %1479 = vmatprep.mubr.bf16.mxu0 0
        %1480 = vmatmul.mubr.bf16.gmra.mxu0 %v1404
        %v1481 = vpop.f32.mrf.mxu0
        %v1482 = vadd.f32 %v1441, %v1481
        %v1483 = vpop.f32.mrf.mxu0
        %v1484 = vadd.f32 %v1443, %v1483
        %v1485 = vpop.f32.mrf.mxu0
        %v1486 = vpop.f32.mrf.mxu0
        %1487 = vdwg.mxu0
        %v1488 = vmax.f32 %v1482, 0.0
        %v1489 = vmax.f32 %v1484, 0.0
        %v1490 = vld [vmem:[%s9] sm:$0xf]
        %v1491 = vpack.c.bf16 %v1488, %v1488
        %v1492 = vpack.c.bf16 %v1489, %v1489
        %v1493 = vld [vmem:[%s10] sm:$0xff]
        %1495 = vset.pattern.permute.xlu0 0
        %1496 = vperm.xlu0 %1495, %v1493
        %v1497 = vpop.permute.xlu0 %1496
        %vm1499 = vcmask 31744
        %v1501 = vsel %vm1499, %v1490, 0
        %vm1503 = vcmask 1041408
        %v1505 = vsel %vm1503, %v1491, 0
        %v1508 = vsel %vm1503, %v1492, 0
        %1510 = vmatprep.subr.bf16.mxu0 0
        %1511 = vmatpush1.bf16.msra.mxu0 0
        %1512 = vmatprep.subr.bf16.mxu0 0
        %1513 = vmatpush1.bf16.msra.mxu0 0
        %1514 = vmatprep.subr.bf16.mxu0 0
        %1515 = vmatpush1.bf16.msra.mxu0 0
        %1516 = vmatprep.subr.bf16.mxu0 0
        %1517 = vmatpush1.bf16.msra.mxu0 0
        %1518 = vmatprep.subr.bf16.mxu0 0
        %1519 = vmatpush1.bf16.msra.mxu0 0
        %1520 = vmatprep.subr.bf16.mxu0 0
        %1521 = vmatpush1.bf16.msra.mxu0 0
        %1522 = vmatprep.subr.bf16.mxu0 0
        %1523 = vmatpush1.bf16.msra.mxu0 0
        %1524 = vmatprep.subr.bf16.mxu0 %v1508
        %1525 = vmatpush1.bf16.msra.mxu0 %v1505
        %1526 = vmatprep.subr.bf16.mxu0 0
        %1527 = vmatpush2.bf16.msra.mxu0 0
        %1528 = vmatprep.subr.bf16.mxu0 0
        %1529 = vmatpush2.bf16.msra.mxu0 0
        %1530 = vmatprep.subr.bf16.mxu0 0
        %1531 = vmatpush2.bf16.msra.mxu0 0
        %1532 = vmatprep.subr.bf16.mxu0 0
        %1533 = vmatpush2.bf16.msra.mxu0 0
        %1534 = vmatprep.subr.bf16.mxu0 0
        %1535 = vmatpush2.bf16.msra.mxu0 0
        %1536 = vmatprep.subr.bf16.mxu0 0
        %1537 = vmatpush2.bf16.msra.mxu0 0
        %1538 = vmatprep.subr.bf16.mxu0 0
        %1539 = vmatpush2.bf16.msra.mxu0 0
        %1540 = vmatprep.subr.bf16.mxu0 0
        %1541 = vmatpush2.bf16.msra.mxu0 0
        %1542 = vmatprep.mubr.bf16.mxu0 0
        %1543 = vmatmul.mubr.bf16.gmra.mxu0 %v1501
        %v1544 = vpop.f32.mrf.mxu0
        %v1545 = vadd.f32 %v1497, %v1544
        %v1546 = vpop.f32.mrf.mxu0
        %v1547 = vadd.f32 %v1497, %v1546
        %v1548 = vpop.f32.mrf.mxu0
        %v1549 = vpop.f32.mrf.mxu0
        %1550 = vdwg.mxu0
        %1551 = vst [vmem:[%s448] sm:$0xff] %v1545
        %1552 = vst [vmem:[%s448 + $0x8] sm:$0xff] %v1547
        %s1553 = sand.u32 %s274, 1
        %s1554 = scalar_lea.sflag [#allocation4], %s1553
        %s1555 = sand.u32 %s274, 1
        %s1556 = smul.addr %s1555, 16
        %s1557 = scalar_lea.vmem [#allocation10], %s1556
        // Predicated region
        $region81: #{tpu_custom_call.1} parent=63 // pred_check
          %p1558 = pneg %p284
        $region82: #{tpu_custom_call.1} parent=63 // pred_check_branch
          %1560 = sbr.rel (%p1558) target = $region84
        $region83: #{tpu_custom_call.1} parent=63 // pred_region
          %s1562 = ssub.s32 256, 256
          %1563 = vsyncadd %s1554, %s1562
          %s1564 = smul.addr %s30, 2
          %s1565 = smul.addr %s1564, 128
          %s1566 = scalar_lea.hbm %s11, %s1565
          %s1568 = sshll.u32 %s1557, 4
          %s1569 = int_to_ptr.vmem [resolvable:$true] %s1568
          %1571 = dma.vmem_to_hbm [thread:$0]  %s1569, 256, %s1566, %s1554
        $region84: #{tpu_custom_call.1} parent=63 // pred_fallthru
          _
      $region64: #{tpu_custom_call.1} parent=5 // pred_fallthru
        _
      %p1572 = scmp.le.s32.totalorder 2, %s25
      // Predicated region
      $region85: #{tpu_custom_call.1} parent=5 // pred_check
        %p1573 = pneg %p1572
      $region86: #{tpu_custom_call.1} parent=5 // pred_check_branch
        %1575 = sbr.rel (%p1573) target = $region88
      $region87: #{tpu_custom_call.1} parent=5 // pred_region
        %s1576 = ssub.s32 %s25, 2
        // Predicated region
        $region89: #{tpu_custom_call.1} parent=87 // pred_check
          %p1577 = pneg %p290
        $region90: #{tpu_custom_call.1} parent=87 // pred_check_branch
          %1579 = sbr.rel (%p1577) target = $region92
        $region91: #{tpu_custom_call.1} parent=87 // pred_region
          %s1580 = sand.u32 %s275, 1
          %s1581 = scalar_lea.sflag [#allocation4], %s1580
          %s1582 = sand.u32 %s275, 1
          %s1583 = smul.addr %s1582, 16
          %s1584 = scalar_lea.vmem [#allocation10], %s1583
          %1585 = dma.done %s1581, 256
        $region92: #{tpu_custom_call.1} parent=87 // pred_fallthru
          _
      $region88: #{tpu_custom_call.1} parent=5 // pred_fallthru
        _
    $region6: #{tpu_custom_call.1} parent=1 // loop_footer
      %s29 = sadd.s32 1, %s25
    $region7: #{tpu_custom_call.1} parent=1 // loop_footer_branch
      %24 = sbr.rel target = $region3
    $region8: #{tpu_custom_call.1} parent=1 // loop_exit
      _
    %1586 = vsyncpa [#allocation3], 1
    %s1587 = scalar_lea.sflag [#allocation3], 1
    %1588 = vsyncpa %s1587, 1
    %1589 = vsyncpa [#allocation6], 1
    %1590 = vsyncpa [#allocation9], 1
    %1591 = vsyncpa [#allocation4], 1
    %s1592 = scalar_lea.sflag [#allocation4], 1
    %1593 = vsyncpa %s1592, 1

</llo_original>
